<compile_context>
chip_gen: v7x
topology: tpu7x:2x2x1
jax: 0.10.0
libtpu: 0.0.40
codegen_flags: <defaults>
</compile_context>

<pallas_src>
import functools

import jax
import jax.numpy as jnp
import numpy as np
from jax import lax
from jax.experimental import pallas as pl
from jax.experimental.pallas import tpu as pltpu


# -----------------------------------------------------------------------------
# Fused kernel: B_TILE images per grid step, everything is 2-D row-stacked.
# -----------------------------------------------------------------------------
def _fused_up1_eval_kernel(x1d_ref, x2p_ref, u_ref, w1_ref, b1_ref,
                           w2_ref, b2_ref, g_ref, o_ref, *, nv):
    f32 = jnp.float32
    cdt = u_ref.dtype                      # MXU operand dtype (f32 or bf16)
    mh = x2p_ref.shape[0]                  # b_tile * HR stacked rows
    m1 = mh - 2                            # rows after conv1 sliding window
    m2 = mh - 4                            # rows after conv2 sliding window
    lw2 = o_ref.shape[1]

    # --- ConvTranspose2d(k=2,s=2) + ReLU ------------------------------------
    # Rows are already parity-interleaved by the wrapper (even rows use the
    # first K-half of u_ref, odd rows the second), so a single dot produces
    # the upsampled rows in the final concat lane layout.  Adding the
    # pre-packed, pre-cropped x2 (disjoint lanes) IS the channel concat.
    up = jnp.dot(x1d_ref[...].astype(cdt), u_ref[...],
                 preferred_element_type=f32)
    cat = jnp.maximum(up, 0.0) + x2p_ref[...]          # [mh, 128] f32

    # --- conv1: 3x3 valid conv + bias + ReLU (split-K over the 3 row taps) ---
    # Windows slide over the stacked rows; rows whose window crosses an image
    # boundary are garbage and are discarded by the wrapper slice.
    mid = b1_ref[...]
    for d in range(3):
        mid = mid + jnp.dot(cat[d:d + m1].astype(cdt), w1_ref[d],
                            preferred_element_type=f32)
    mid = jnp.maximum(mid, 0.0)                         # [m1, 128]

    # --- conv2: 3x3 valid conv + bias + ReLU ----------------------------------
    z = b2_ref[...]
    for d in range(3):
        z = z + jnp.dot(mid[d:d + m2].astype(cdt), w2_ref[d],
                        preferred_element_type=f32)
    z = jnp.maximum(z, 0.0)                             # [m2, 128]

    # --- UnetEval_torch head: softmax over the Cout lanes of each pixel ------
    # Row max is a per-pixel constant within each group (z >= 0 post-ReLU, so
    # the zero-padded lanes never win); denom is clamped so underflow cannot
    # produce 0/0 NaNs.
    zmax = jnp.max(z, axis=1, keepdims=True)
    e = jnp.exp(z - zmax)
    denom = jnp.dot(e.astype(cdt), g_ref[...], preferred_element_type=f32)
    denom = jnp.maximum(denom, 1e-30)
    approx = bool(np.dtype(cdt) == np.dtype(jnp.bfloat16))
    sm = e * pl.reciprocal(denom, approx=approx)

    # zero the padded lanes (the wrapper only reads lanes < nv anyway).
    lane = lax.broadcasted_iota(jnp.int32, sm.shape, 1)
    sm = jnp.where(lane < nv, sm, 0.0)

    # lane-dense full-width store; last 4 rows of the block are never read.
    o_ref[pl.ds(0, m2), :] = sm.astype(o_ref.dtype)
    o_ref[pl.ds(m2, 4), :] = jnp.zeros((4, lw2), o_ref.dtype)


# -----------------------------------------------------------------------------
# Wrapper: packs weights/inputs into the row-stacked, lane-padded matmul form,
# calls the fused kernel, un-packs the output back to NHWC.
# -----------------------------------------------------------------------------
def up1_eval_forward(params, x1_nchw, x2_nchw, *, compute_dtype=jnp.float32,
                     central_fraction=56.0 / 64.0, b_tile=None):
    f32 = jnp.float32
    n, cin, h1, w1s = x1_nchw.shape
    _, cin2, h2, w2s = x2_nchw.shape
    w_up = params["w_up"]                       # [Cin, Coutup, 2, 2]
    coutup = w_up.shape[1]
    ccat = coutup + cin2
    cmid = params["w1"].shape[-1]
    cout = params["w2"].shape[-1]

    hc, wc = 2 * h1, 2 * w1s                    # upsampled / concat spatial size
    ho, wo = hc - 2, wc - 2                     # after conv1 (valid)
    ho2, wo2 = ho - 2, wo - 2                   # after conv2 (valid)

    # central-crop offsets (same int() rounding as the torch module path)
    oh = int((h2 - h2 * central_fraction) / 2)
    ow = int((w2s - w2s * central_fraction) / 2)
    assert int(h2 * central_fraction) == hc and int(w2s * central_fraction) == wc
    assert oh + hc <= h2 and ow + wc <= w2s

    hr = ((hc + 7) // 8) * 8                    # per-image row pad (sublane align)
    lw = ((wc * ccat + 127) // 128) * 128       # concat lane width (128 aligned)
    lw1 = ((wo * cmid + 127) // 128) * 128
    lw2 = ((wo2 * cout + 127) // 128) * 128
    nv = wo2 * cout                             # valid output lanes

    # --- batch-tile choice: ~128-256 matmul rows, keep >=2 grid steps --------
    if b_tile is None:
        b_tile = max(1, min(n, 256 // hr))
        while n % b_tile:
            b_tile -= 1
        if n // b_tile < 2 and n > 1:
            b_tile = max(1, b_tile // 2)
            while n % b_tile:
                b_tile -= 1
    assert n % b_tile == 0

    # --- x1 packed: rows duplicated per output parity, parity selects which
    #     half of the up-weight's K axis is active -----------------------------
    x1h = jnp.transpose(x1_nchw, (0, 2, 3, 1)).reshape(n, h1, w1s * cin)
    zero = jnp.zeros_like(x1h)
    x1d = jnp.stack([jnp.concatenate([x1h, zero], axis=-1),
                     jnp.concatenate([zero, x1h], axis=-1)], axis=2)
    x1d = x1d.reshape(n, hc, 2 * w1s * cin)
    x1d = jnp.pad(x1d, ((0, 0), (0, hr - hc), (0, 0)))
    x1d = x1d.reshape(n * hr, 2 * w1s * cin).astype(f32)

    # --- x2 pre-cropped + pre-packed into the concat lane layout -------------
    x2c = x2_nchw[:, :, oh:oh + hc, ow:ow + wc]             # [N,Cin2,Hc,Wc]
    x2h = jnp.transpose(x2c, (0, 2, 3, 1)).astype(f32)      # [N,Hc,Wc,Cin2]
    x2g = jnp.concatenate([jnp.zeros((n, hc, wc, coutup), f32), x2h], axis=-1)
    x2p = x2g.reshape(n, hc, wc * ccat)
    x2p = jnp.pad(x2p, ((0, 0), (0, hr - hc), (0, lw - wc * ccat)))
    x2p = x2p.reshape(n * hr, lw)

    # --- conv-transpose weights -> single stacked matrix [2*W1*Cin, LW] ------
    col1 = np.zeros((2, w1s, coutup, lw), np.float32)
    for b in range(2):
        for j in range(w1s):
            for o in range(coutup):
                col1[b, j, o, (2 * j + b) * ccat + o] = 1.0
    u = jnp.einsum("coab,bjol->ajcl", w_up.astype(f32), jnp.asarray(col1))
    u = u.reshape(2 * w1s * cin, lw).astype(compute_dtype)

    # --- 3x3 valid convs as 3 per-row-tap weight matrices (split-K), padded
    #     to 128-lane-aligned in/out widths -----------------------------------
    def conv_taps(k, w_in, w_out, lw_in, lw_out):
        c_i, c_o = k.shape[2], k.shape[3]
        t = np.zeros((3, w_in, w_out), np.float32)
        for dx in range(3):
            for w in range(w_out):
                t[dx, w + dx, w] = 1.0
        m = jnp.einsum("yxcm,xiw->yicwm", k.astype(f32), jnp.asarray(t))
        m = m.reshape(3, w_in * c_i, w_out * c_o)
        m = jnp.pad(m, ((0, 0), (0, lw_in - w_in * c_i),
                        (0, lw_out - w_out * c_o)))
        return m.astype(compute_dtype)

    w1t = conv_taps(params["w1"], wc, wo, lw, lw1)      # [3, LW,  LW1]
    w2t = conv_taps(params["w2"], wo, wo2, lw1, lw2)    # [3, LW1, LW2]
    b1p = jnp.pad(jnp.tile(params["b1"].reshape(1, cmid).astype(f32), (1, wo)),
                  ((0, 0), (0, lw1 - wo * cmid)))
    b2p = jnp.pad(jnp.tile(params["b2"].reshape(1, cout).astype(f32), (1, wo2)),
                  ((0, 0), (0, lw2 - wo2 * cout)))

    # --- softmax group-sum matrix (0/1, exact in bf16), 128-lane padded ------
    g_np = np.zeros((lw2, lw2), np.float32)
    idx = np.arange(nv)
    g_np[:nv, :nv] = (idx[:, None] // cout == idx[None, :] // cout)
    g = jnp.asarray(g_np).astype(compute_dtype)

    rows_blk = b_tile * hr
    kernel = functools.partial(_fused_up1_eval_kernel, nv=nv)
    out = pl.pallas_call(
        kernel,
        out_shape=jax.ShapeDtypeStruct((n * hr, lw2), f32),
        grid=(n // b_tile,),
        in_specs=[
            pl.BlockSpec((rows_blk, 2 * w1s * cin), lambda i: (i, 0)),
            pl.BlockSpec((rows_blk, lw), lambda i: (i, 0)),
            pl.BlockSpec(u.shape, lambda i: (0, 0)),
            pl.BlockSpec(w1t.shape, lambda i: (0, 0, 0)),
            pl.BlockSpec(b1p.shape, lambda i: (0, 0)),
            pl.BlockSpec(w2t.shape, lambda i: (0, 0, 0)),
            pl.BlockSpec(b2p.shape, lambda i: (0, 0)),
            pl.BlockSpec(g.shape, lambda i: (0, 0)),
        ],
        out_specs=pl.BlockSpec((rows_blk, lw2), lambda i: (i, 0)),
        compiler_params=pltpu.CompilerParams(
            dimension_semantics=("parallel",),
            vmem_limit_bytes=32 * 1024 * 1024),
    )(x1d, x2p, u, w1t, b1p, w2t, b2p, g)

    # un-pack the lane-dense slab -> NHWC (matches out.permute(0, 2, 3, 1))
    out = out.reshape(n, hr, lw2)[:, :ho2, :nv]
    return out.reshape(n, ho2, wo2, cout)


# -----------------------------------------------------------------------------
# Pure-JAX reference (for correctness check against the Pallas path).
# -----------------------------------------------------------------------------
def central_crop(x_nchw, central_fraction):
    if central_fraction == 1.0:
        return x_nchw
    _, _, h, w = x_nchw.shape
    start_h = int((h - h * central_fraction) / 2)
    end_h = start_h + int(h * central_fraction)
    start_w = int((w - w * central_fraction) / 2)
    end_w = start_w + int(w * central_fraction)
    return x_nchw[:, :, start_h:end_h, start_w:end_w]


def reference_forward(params, x1, x2):
    w_up = params["w_up"]                                   # [Cin, Coutup, 2, 2]
    n, cin, h, w = x1.shape
    coutup = w_up.shape[1]
    y = jnp.einsum("ncij,cdab->ndiajb", x1, w_up).reshape(n, coutup, 2 * h, 2 * w)
    y = jnp.maximum(y, 0.0)
    x2c = central_crop(x2, 56.0 / 64.0)
    x = jnp.concatenate([y, x2c], axis=1)

    w1_oihw = jnp.transpose(params["w1"], (3, 2, 0, 1))
    z = lax.conv_general_dilated(x, w1_oihw, (1, 1), "VALID",
                                 dimension_numbers=("NCHW", "OIHW", "NCHW"))
    z = jnp.maximum(z + params["b1"].reshape(1, -1, 1, 1), 0.0)
    w2_oihw = jnp.transpose(params["w2"], (3, 2, 0, 1))
    z = lax.conv_general_dilated(z, w2_oihw, (1, 1), "VALID",
                                 dimension_numbers=("NCHW", "OIHW", "NCHW"))
    z = jnp.maximum(z + params["b2"].reshape(1, -1, 1, 1), 0.0)

    # UnetEval_torch head: permute(0, 2, 3, 1) + softmax over channels.
    z = jnp.transpose(z, (0, 2, 3, 1))
    return jax.nn.softmax(z, axis=-1)


if __name__ == "__main__":
    key = jax.random.PRNGKey(0)
    in_ch, out_ch = 4, 4          # Up1(in_channels=4, out_channels=4)
    N = 4
    H1 = W1 = 7                   # ConvTranspose(k=2, s=2) -> 14x14
    H2 = W2 = 16                  # CentralCrop(56/64): 16 -> 14

    k1, k2, k3, k4, k5, k6, k7 = jax.random.split(key, 7)
    x1 = jax.random.normal(k1, (N, in_ch, H1, W1), jnp.float32)
    x2 = jax.random.normal(k2, (N, in_ch // 2, H2, W2), jnp.float32)

    params = {
        # ConvTranspose2d(in_ch, in_ch//2, k=2, s=2, bias=False): [Cin,Cout,2,2]
        "w_up": jax.random.normal(k3, (in_ch, in_ch // 2, 2, 2), jnp.float32) * 0.3,
        # DoubleConv(in_ch, out_ch): conv1 [3,3,Cin,Cmid], conv2 [3,3,Cmid,Cout]
        "w1": jax.random.normal(k4, (3, 3, in_ch, out_ch), jnp.float32) * 0.3,
        "b1": jax.random.normal(k5, (1, out_ch), jnp.float32) * 0.1,
        "w2": jax.random.normal(k6, (3, 3, out_ch, out_ch), jnp.float32) * 0.3,
        "b2": jax.random.normal(k7, (1, out_ch), jnp.float32) * 0.1,
    }

    ref = jax.block_until_ready(reference_forward(params, x1, x2))

    # f32 path, default batch tile (2 grid steps) -- strict check.
    out_f32 = jax.block_until_ready(up1_eval_forward(params, x1, x2))
    assert out_f32.shape == (N, 10, 10, out_ch), out_f32.shape
    np.testing.assert_allclose(np.asarray(out_f32), np.asarray(ref),
                               rtol=1e-4, atol=1e-4)

    # f32 path, whole batch in one grid step (exercises the batch-folded rows).
    out_f32_b4 = jax.block_until_ready(
        up1_eval_forward(params, x1, x2, b_tile=4))
    np.testing.assert_allclose(np.asarray(out_f32_b4), np.asarray(ref),
                               rtol=1e-4, atol=1e-4)

    # bf16 MXU-operand path; f32 elementwise/accumulation, looser tolerance.
    out_bf16 = jax.block_until_ready(
        up1_eval_forward(params, x1, x2, compute_dtype=jnp.bfloat16))
    np.testing.assert_allclose(np.asarray(out_bf16), np.asarray(ref),
                               rtol=7.5e-2, atol=7.5e-2)

    print("KERNEL_OK")
</pallas_src>

<mosaic_0001>
module attributes {stable_mosaic.version = 11 : i64} {
  func.func @_fused_up1_eval_kernel(%arg0: i32, %arg1: memref<32x56xf32, #tpu.memory_space<vmem>>, %arg2: memref<32x128xf32, #tpu.memory_space<vmem>>, %arg3: memref<56x128xf32, #tpu.memory_space<vmem>>, %arg4: memref<3x128x128xf32, #tpu.memory_space<vmem>>, %arg5: memref<1x128xf32, #tpu.memory_space<vmem>>, %arg6: memref<3x128x128xf32, #tpu.memory_space<vmem>>, %arg7: memref<1x128xf32, #tpu.memory_space<vmem>>, %arg8: memref<128x128xf32, #tpu.memory_space<vmem>>, %arg9: memref<32x128xf32, #tpu.memory_space<vmem>>) attributes {dimension_semantics = [#tpu.dimension_semantics<parallel>], iteration_bounds = array<i64: 2>, scalar_prefetch = 0 : i64, scratch_operands = 0 : i64, tpu.core_type = #tpu.core_type<tc>, window_params = [{transform_indices = @transform_0, window_bounds = array<i64: 32, 56>}, {transform_indices = @transform_1, window_bounds = array<i64: 32, 128>}, {pipeline_mode = #tpu.pipeline_mode<synchronous>, transform_indices = @transform_2, window_bounds = array<i64: 56, 128>}, {pipeline_mode = #tpu.pipeline_mode<synchronous>, transform_indices = @transform_3, window_bounds = array<i64: 3, 128, 128>}, {pipeline_mode = #tpu.pipeline_mode<synchronous>, transform_indices = @transform_4, window_bounds = array<i64: 1, 128>}, {pipeline_mode = #tpu.pipeline_mode<synchronous>, transform_indices = @transform_5, window_bounds = array<i64: 3, 128, 128>}, {pipeline_mode = #tpu.pipeline_mode<synchronous>, transform_indices = @transform_6, window_bounds = array<i64: 1, 128>}, {pipeline_mode = #tpu.pipeline_mode<synchronous>, transform_indices = @transform_7, window_bounds = array<i64: 128, 128>}, {transform_indices = @transform_8, window_bounds = array<i64: 32, 128>}]} {
    %c0 = arith.constant 0 : index
    %c0_0 = arith.constant 0 : index
    %0 = vector.load %arg1[%c0, %c0_0] : memref<32x56xf32, #tpu.memory_space<vmem>>, vector<32x56xf32>
    %c0_1 = arith.constant 0 : index
    %c0_2 = arith.constant 0 : index
    %1 = vector.load %arg3[%c0_1, %c0_2] : memref<56x128xf32, #tpu.memory_space<vmem>>, vector<56x128xf32>
    %cst = arith.constant dense<0.000000e+00> : vector<32x128xf32>
    %2 = tpu.matmul %0, %1, %cst {dimension_numbers = #tpu.dot_dimension_numbers<[1], [0], [0], [1], [0, 0, 1, 1], [], []>} : vector<32x56xf32>, vector<56x128xf32>, vector<32x128xf32> -> vector<32x128xf32>
    %cst_3 = arith.constant 0.000000e+00 : f32
    %3 = vector.broadcast %cst_3 : f32 to vector<32x128xf32>
    %4 = arith.maximumf %2, %3 : vector<32x128xf32>
    %c0_4 = arith.constant 0 : index
    %c0_5 = arith.constant 0 : index
    %5 = vector.load %arg2[%c0_4, %c0_5] : memref<32x128xf32, #tpu.memory_space<vmem>>, vector<32x128xf32>
    %6 = arith.addf %4, %5 : vector<32x128xf32>
    %c0_6 = arith.constant 0 : index
    %c0_7 = arith.constant 0 : index
    %7 = vector.load %arg5[%c0_6, %c0_7] : memref<1x128xf32, #tpu.memory_space<vmem>>, vector<1x128xf32>
    %8 = vector.extract_strided_slice %6 {offsets = [0, 0], sizes = [30, 128], strides = [1, 1]} : vector<32x128xf32> to vector<30x128xf32>
    %c0_8 = arith.constant 0 : index
    %c0_9 = arith.constant 0 : index
    %c0_10 = arith.constant 0 : index
    %9 = vector.load %arg4[%c0_8, %c0_9, %c0_10] : memref<3x128x128xf32, #tpu.memory_space<vmem>>, vector<1x128x128xf32>
    %10 = vector.shape_cast %9 : vector<1x128x128xf32> to vector<128x128xf32>
    %cst_11 = arith.constant dense<0.000000e+00> : vector<30x128xf32>
    %11 = tpu.matmul %8, %10, %cst_11 {dimension_numbers = #tpu.dot_dimension_numbers<[1], [0], [0], [1], [0, 0, 1, 1], [], []>} : vector<30x128xf32>, vector<128x128xf32>, vector<30x128xf32> -> vector<30x128xf32>
    %12 = vector.broadcast %7 : vector<1x128xf32> to vector<30x128xf32>
    %13 = arith.addf %12, %11 : vector<30x128xf32>
    %14 = vector.extract_strided_slice %6 {offsets = [1, 0], sizes = [30, 128], strides = [1, 1]} : vector<32x128xf32> to vector<30x128xf32>
    %c1 = arith.constant 1 : index
    %c0_12 = arith.constant 0 : index
    %c0_13 = arith.constant 0 : index
    %15 = vector.load %arg4[%c1, %c0_12, %c0_13] : memref<3x128x128xf32, #tpu.memory_space<vmem>>, vector<1x128x128xf32>
    %16 = vector.shape_cast %15 : vector<1x128x128xf32> to vector<128x128xf32>
    %cst_14 = arith.constant dense<0.000000e+00> : vector<30x128xf32>
    %17 = tpu.matmul %14, %16, %cst_14 {dimension_numbers = #tpu.dot_dimension_numbers<[1], [0], [0], [1], [0, 0, 1, 1], [], []>} : vector<30x128xf32>, vector<128x128xf32>, vector<30x128xf32> -> vector<30x128xf32>
    %18 = arith.addf %13, %17 : vector<30x128xf32>
    %19 = vector.extract_strided_slice %6 {offsets = [2, 0], sizes = [30, 128], strides = [1, 1]} : vector<32x128xf32> to vector<30x128xf32>
    %c2 = arith.constant 2 : index
    %c0_15 = arith.constant 0 : index
    %c0_16 = arith.constant 0 : index
    %20 = vector.load %arg4[%c2, %c0_15, %c0_16] : memref<3x128x128xf32, #tpu.memory_space<vmem>>, vector<1x128x128xf32>
    %21 = vector.shape_cast %20 : vector<1x128x128xf32> to vector<128x128xf32>
    %cst_17 = arith.constant dense<0.000000e+00> : vector<30x128xf32>
    %22 = tpu.matmul %19, %21, %cst_17 {dimension_numbers = #tpu.dot_dimension_numbers<[1], [0], [0], [1], [0, 0, 1, 1], [], []>} : vector<30x128xf32>, vector<128x128xf32>, vector<30x128xf32> -> vector<30x128xf32>
    %23 = arith.addf %18, %22 : vector<30x128xf32>
    %cst_18 = arith.constant 0.000000e+00 : f32
    %24 = vector.broadcast %cst_18 : f32 to vector<30x128xf32>
    %25 = arith.maximumf %23, %24 : vector<30x128xf32>
    %c0_19 = arith.constant 0 : index
    %c0_20 = arith.constant 0 : index
    %26 = vector.load %arg7[%c0_19, %c0_20] : memref<1x128xf32, #tpu.memory_space<vmem>>, vector<1x128xf32>
    %27 = vector.extract_strided_slice %25 {offsets = [0, 0], sizes = [28, 128], strides = [1, 1]} : vector<30x128xf32> to vector<28x128xf32>
    %c0_21 = arith.constant 0 : index
    %c0_22 = arith.constant 0 : index
    %c0_23 = arith.constant 0 : index
    %28 = vector.load %arg6[%c0_21, %c0_22, %c0_23] : memref<3x128x128xf32, #tpu.memory_space<vmem>>, vector<1x128x128xf32>
    %29 = vector.shape_cast %28 : vector<1x128x128xf32> to vector<128x128xf32>
    %cst_24 = arith.constant dense<0.000000e+00> : vector<28x128xf32>
    %30 = tpu.matmul %27, %29, %cst_24 {dimension_numbers = #tpu.dot_dimension_numbers<[1], [0], [0], [1], [0, 0, 1, 1], [], []>} : vector<28x128xf32>, vector<128x128xf32>, vector<28x128xf32> -> vector<28x128xf32>
    %31 = vector.broadcast %26 : vector<1x128xf32> to vector<28x128xf32>
    %32 = arith.addf %31, %30 : vector<28x128xf32>
    %33 = vector.extract_strided_slice %25 {offsets = [1, 0], sizes = [28, 128], strides = [1, 1]} : vector<30x128xf32> to vector<28x128xf32>
    %c1_25 = arith.constant 1 : index
    %c0_26 = arith.constant 0 : index
    %c0_27 = arith.constant 0 : index
    %34 = vector.load %arg6[%c1_25, %c0_26, %c0_27] : memref<3x128x128xf32, #tpu.memory_space<vmem>>, vector<1x128x128xf32>
    %35 = vector.shape_cast %34 : vector<1x128x128xf32> to vector<128x128xf32>
    %cst_28 = arith.constant dense<0.000000e+00> : vector<28x128xf32>
    %36 = tpu.matmul %33, %35, %cst_28 {dimension_numbers = #tpu.dot_dimension_numbers<[1], [0], [0], [1], [0, 0, 1, 1], [], []>} : vector<28x128xf32>, vector<128x128xf32>, vector<28x128xf32> -> vector<28x128xf32>
    %37 = arith.addf %32, %36 : vector<28x128xf32>
    %38 = vector.extract_strided_slice %25 {offsets = [2, 0], sizes = [28, 128], strides = [1, 1]} : vector<30x128xf32> to vector<28x128xf32>
    %c2_29 = arith.constant 2 : index
    %c0_30 = arith.constant 0 : index
    %c0_31 = arith.constant 0 : index
    %39 = vector.load %arg6[%c2_29, %c0_30, %c0_31] : memref<3x128x128xf32, #tpu.memory_space<vmem>>, vector<1x128x128xf32>
    %40 = vector.shape_cast %39 : vector<1x128x128xf32> to vector<128x128xf32>
    %cst_32 = arith.constant dense<0.000000e+00> : vector<28x128xf32>
    %41 = tpu.matmul %38, %40, %cst_32 {dimension_numbers = #tpu.dot_dimension_numbers<[1], [0], [0], [1], [0, 0, 1, 1], [], []>} : vector<28x128xf32>, vector<128x128xf32>, vector<28x128xf32> -> vector<28x128xf32>
    %42 = arith.addf %37, %41 : vector<28x128xf32>
    %cst_33 = arith.constant 0.000000e+00 : f32
    %43 = vector.broadcast %cst_33 : f32 to vector<28x128xf32>
    %44 = arith.maximumf %42, %43 : vector<28x128xf32>
    %cst_34 = arith.constant dense<0xFF800000> : vector<28xf32>
    %45 = vector.multi_reduction <maximumf>, %44, %cst_34 [1] : vector<28x128xf32> to vector<28xf32>
    %46 = vector.shape_cast %45 : vector<28xf32> to vector<28x1xf32>
    %47 = vector.broadcast %46 : vector<28x1xf32> to vector<28x128xf32>
    %48 = arith.subf %44, %47 : vector<28x128xf32>
    %49 = math.exp %48 : vector<28x128xf32>
    %c0_35 = arith.constant 0 : index
    %c0_36 = arith.constant 0 : index
    %50 = vector.load %arg8[%c0_35, %c0_36] : memref<128x128xf32, #tpu.memory_space<vmem>>, vector<128x128xf32>
    %cst_37 = arith.constant dense<0.000000e+00> : vector<28x128xf32>
    %51 = tpu.matmul %49, %50, %cst_37 {dimension_numbers = #tpu.dot_dimension_numbers<[1], [0], [0], [1], [0, 0, 1, 1], [], []>} : vector<28x128xf32>, vector<128x128xf32>, vector<28x128xf32> -> vector<28x128xf32>
    %cst_38 = arith.constant 1.000000e-30 : f32
    %52 = vector.broadcast %cst_38 : f32 to vector<28x128xf32>
    %53 = arith.maximumf %51, %52 : vector<28x128xf32>
    %54 = tpu.reciprocal %53 : vector<28x128xf32> -> vector<28x128xf32>
    %55 = arith.mulf %49, %54 : vector<28x128xf32>
    %56 = tpu.iota {dimensions = array<i32: 1>} : vector<28x128xi32>
    %c40_i32 = arith.constant 40 : i32
    %57 = vector.broadcast %c40_i32 : i32 to vector<28x128xi32>
    %58 = arith.cmpi slt, %56, %57 : vector<28x128xi32>
    %cst_39 = arith.constant 0.000000e+00 : f32
    %59 = vector.broadcast %cst_39 : f32 to vector<28x128xf32>
    %60 = arith.select %58, %55, %59 : vector<28x128xi1>, vector<28x128xf32>
    %c0_40 = arith.constant 0 : index
    %c0_41 = arith.constant 0 : index
    %61 = vector.load %arg9[%c0_40, %c0_41] : memref<32x128xf32, #tpu.memory_space<vmem>>, vector<28x128xf32>
    tpu.vector_store %arg9[%c0_40, %c0_41], %60 {strides = array<i32>} : memref<32x128xf32, #tpu.memory_space<vmem>>, vector<28x128xf32>,
    %cst_42 = arith.constant 0.000000e+00 : f32
    %62 = vector.broadcast %cst_42 : f32 to vector<4x128xf32>
    %c28 = arith.constant 28 : index
    %c0_43 = arith.constant 0 : index
    %63 = vector.load %arg9[%c28, %c0_43] : memref<32x128xf32, #tpu.memory_space<vmem>>, vector<4x128xf32>
    tpu.vector_store %arg9[%c28, %c0_43], %62 {strides = array<i32>} : memref<32x128xf32, #tpu.memory_space<vmem>>, vector<4x128xf32>,
    return
  }
  func.func @transform_0(%arg0: i32) -> (i32, i32) {
    %c0_i32 = arith.constant 0 : i32
    %c0_i32_0 = arith.constant 0 : i32
    return %arg0, %c0_i32 : i32, i32
  }
  func.func @transform_1(%arg0: i32) -> (i32, i32) {
    %c0_i32 = arith.constant 0 : i32
    %c0_i32_0 = arith.constant 0 : i32
    return %arg0, %c0_i32 : i32, i32
  }
  func.func @transform_2(%arg0: i32) -> (i32, i32) {
    %c0_i32 = arith.constant 0 : i32
    %c0_i32_0 = arith.constant 0 : i32
    %c0_i32_1 = arith.constant 0 : i32
    return %c0_i32, %c0_i32_0 : i32, i32
  }
  func.func @transform_3(%arg0: i32) -> (i32, i32, i32) {
    %c0_i32 = arith.constant 0 : i32
    %c0_i32_0 = arith.constant 0 : i32
    %c0_i32_1 = arith.constant 0 : i32
    %c0_i32_2 = arith.constant 0 : i32
    return %c0_i32, %c0_i32_0, %c0_i32_1 : i32, i32, i32
  }
  func.func @transform_4(%arg0: i32) -> (i32, i32) {
    %c0_i32 = arith.constant 0 : i32
    %c0_i32_0 = arith.constant 0 : i32
    %c0_i32_1 = arith.constant 0 : i32
    return %c0_i32, %c0_i32_0 : i32, i32
  }
  func.func @transform_5(%arg0: i32) -> (i32, i32, i32) {
    %c0_i32 = arith.constant 0 : i32
    %c0_i32_0 = arith.constant 0 : i32
    %c0_i32_1 = arith.constant 0 : i32
    %c0_i32_2 = arith.constant 0 : i32
    return %c0_i32, %c0_i32_0, %c0_i32_1 : i32, i32, i32
  }
  func.func @transform_6(%arg0: i32) -> (i32, i32) {
    %c0_i32 = arith.constant 0 : i32
    %c0_i32_0 = arith.constant 0 : i32
    %c0_i32_1 = arith.constant 0 : i32
    return %c0_i32, %c0_i32_0 : i32, i32
  }
  func.func @transform_7(%arg0: i32) -> (i32, i32) {
    %c0_i32 = arith.constant 0 : i32
    %c0_i32_0 = arith.constant 0 : i32
    %c0_i32_1 = arith.constant 0 : i32
    return %c0_i32, %c0_i32_0 : i32, i32
  }
  func.func @transform_8(%arg0: i32) -> (i32, i32) {
    %c0_i32 = arith.constant 0 : i32
    %c0_i32_0 = arith.constant 0 : i32
    return %arg0, %c0_i32 : i32, i32
  }
}

</mosaic_0001>

<llo_original>
// kernel: tpu_custom_call.1
$region0: #{tpu_custom_call.1}
  #allocation0 [shape = 'u32[]', space=smem, size = 0x4, offset = 0x4, fixed_abs, tag = 'smem constant byte address 0x4 - core index']
  #allocation1 [shape = 'u32[144,128]{1,0:T(1,128)}', space=vmem, size = 0x12000, scoped, tag = 'internal scratch']
  %s0 = inlined_call_operand.vmem [shape: f32[64,56], index: 0, kind: input, shape index: {}]
  %s1 = inlined_call_operand.hbm [shape: f32[64,128], index: 1, kind: input, shape index: {}]
  %s2 = inlined_call_operand.hbm [shape: f32[56,128], index: 2, kind: input, shape index: {}]
  %s3 = inlined_call_operand.hbm [shape: f32[3,128,128], index: 3, kind: input, shape index: {}]
  %s4 = inlined_call_operand.vmem [shape: f32[1,128], index: 4, kind: input, shape index: {}]
  %s5 = inlined_call_operand.hbm [shape: f32[3,128,128], index: 5, kind: input, shape index: {}]
  %s6 = inlined_call_operand.vmem [shape: f32[1,128], index: 6, kind: input, shape index: {}]
  %s7 = inlined_call_operand.vmem [shape: f32[128,128], index: 7, kind: input, shape index: {}]
  %s8 = inlined_call_operand.hbm [shape: f32[64,128], index: 8, kind: output, shape index: {}]
  %s9 = sld [smem:[#allocation0]]
  $region81: #{tpu_custom_call.1} parent=0
    _
  %s11 = ssub.s32 1, %s9
  %s12 = scalar_select 0, %s11, %s9
  $region1: #{tpu_custom_call.1} parent=0
    #allocation2 [shape = 'u8[32768]{0}', space=vmem, size = 0x8000, scoped, tag = 'input window, operand 1']
    #allocation3 [shape = 's32[2]{0}', space=sflag, size = 0x8, scoped, tag = 'scoped memory for tpu_custom_call.1']
    #allocation4 [shape = 's32[2]{0}', space=sflag, size = 0x8, scoped, tag = 'scoped memory for tpu_custom_call.1']
    #allocation5 [shape = 'u8[28672]{0}', space=vmem, size = 0x7000, scoped, tag = 'input window, operand 2, single buffered']
    #allocation6 [shape = 's32[1]{0}', space=sflag, size = 0x4, scoped, tag = 'scoped memory for tpu_custom_call.1']
    #allocation7 [shape = 'u8[196608]{0}', space=vmem, size = 0x30000, scoped, tag = 'input window, operand 3, single buffered']
    #allocation8 [shape = 'u8[196608]{0}', space=vmem, size = 0x30000, scoped, tag = 'input window, operand 5, single buffered']
    #allocation9 [shape = 's32[1]{0}', space=sflag, size = 0x4, scoped, tag = 'scoped memory for tpu_custom_call.1']
    #allocation10 [shape = 'u8[32768]{0}', space=vmem, size = 0x8000, scoped, tag = 'output window, operand 0']
    %13 = vsyncpa [#allocation3], 0
    %s14 = scalar_lea.sflag [#allocation3], 1
    %15 = vsyncpa %s14, 0
    %16 = vsyncpa [#allocation6], 0
    %17 = vsyncpa [#allocation9], 0
    %18 = vsyncpa [#allocation4], 0
    %s19 = scalar_lea.sflag [#allocation4], 1
    %20 = vsyncpa %s19, 0
    loop: start=0, step=1, limit=4
    $region2: #{tpu_custom_call.1} parent=1 // loop_pre_header
      _
    $region3: #{tpu_custom_call.1} parent=1 // loop_header
      %s22 = sphi 0, %s26
      %p23 = scmp.ge.s32.totalorder %s22, 4
      %s32 = sphi 0, %s34
      %s35 = sphi 0, %s32
      %s36 = sphi 0, %s35
      %s52 = sphi 0, %s36
      %s58 = sphi 0, %s60
      %s61 = sphi 0, %s58
      %s62 = sphi 0, %s61
      %s78 = sphi 0, %s62
      %s82 = sphi 0, %s82
      %s84 = sphi 0, %s82
      %s85 = sphi 0, %s84
      %s99 = sphi 0, %s85
      %s103 = sphi 0, %s103
      %s105 = sphi 0, %s103
      %s106 = sphi 0, %s105
      %s120 = sphi 0, %s106
      %s124 = sphi 0, %s124
      %s126 = sphi 0, %s124
      %s127 = sphi 0, %s126
      %s141 = sphi 0, %s127
      %s145 = sphi 0, %s145
      %s147 = sphi 0, %s145
      %s148 = sphi 0, %s147
      %s162 = sphi 0, %s148
      %s166 = sphi 0, %s166
      %s168 = sphi 0, %s166
      %s169 = sphi 0, %s168
      %s183 = sphi 0, %s169
      %s187 = sphi 0, %s187
      %s189 = sphi 0, %s187
      %s190 = sphi 0, %s189
      %s204 = sphi 0, %s190
      %s210 = sphi 0, %s212
      %s213 = sphi 0, %s210
      %s214 = sphi 0, %s213
      %s230 = sphi 0, %s214
    $region4: #{tpu_custom_call.1} parent=1 // loop_header_branch
      %25 = sbr.rel (%p23) target = $region8
    $region5: #{tpu_custom_call.1} parent=1 // loop_body
      %s27 = ssub.s32 %s22, 1
      %s28 = ssub.s32 %s22, 2
      %s29 = sadd.s32 %s22, 1
      %s30 = ssub.s32 %s22, %s29
      %p31 = scmp.eq.s32.totalorder %s30, 0
      %s33 = sadd.s32 %s32, 1
      %s34 = scalar_select %p31, %s32, %s33
      %p37 = pneg %p31
      %p38 = scmp.eq.s32.totalorder %s22, 1
      %p39 = por %p37, %p38
      %p40 = scmp.ne.s32.totalorder %s32, %s35
      %p41 = scmp.eq.s32.totalorder %s22, 0
      %p42 = por %p40, %p41
      %p43 = scmp.ne.s32.totalorder %s32, %s35
      %p44 = scmp.eq.s32.totalorder %s27, 1
      %p45 = por %p43, %p44
      %p46 = scmp.ne.s32.totalorder %s35, %s36
      %p47 = scmp.eq.s32.totalorder %s27, 0
      %p48 = por %p46, %p47
      %p49 = scmp.ne.s32.totalorder %s35, %s36
      %p50 = scmp.eq.s32.totalorder %s28, 1
      %p51 = por %p49, %p50
      %p53 = scmp.ne.s32.totalorder %s36, %s52
      %p54 = scmp.eq.s32.totalorder %s28, 0
      %p55 = por %p53, %p54
      %s56 = ssub.s32 %s22, %s29
      %p57 = scmp.eq.s32.totalorder %s56, 0
      %s59 = sadd.s32 %s58, 1
      %s60 = scalar_select %p57, %s58, %s59
      %p63 = pneg %p57
      %p64 = scmp.eq.s32.totalorder %s22, 1
      %p65 = por %p63, %p64
      %p66 = scmp.ne.s32.totalorder %s58, %s61
      %p67 = scmp.eq.s32.totalorder %s22, 0
      %p68 = por %p66, %p67
      %p69 = scmp.ne.s32.totalorder %s58, %s61
      %p70 = scmp.eq.s32.totalorder %s27, 1
      %p71 = por %p69, %p70
      %p72 = scmp.ne.s32.totalorder %s61, %s62
      %p73 = scmp.eq.s32.totalorder %s27, 0
      %p74 = por %p72, %p73
      %p75 = scmp.ne.s32.totalorder %s61, %s62
      %p76 = scmp.eq.s32.totalorder %s28, 1
      %p77 = por %p75, %p76
      %p79 = scmp.ne.s32.totalorder %s62, %s78
      %p80 = scmp.eq.s32.totalorder %s28, 0
      %p81 = por %p79, %p80
      %s83 = sadd.s32 %s82, 1
      %p86 = scmp.eq.s32.totalorder %s22, 1
      %p87 = scmp.ne.s32.totalorder %s82, %s84
      %p88 = scmp.eq.s32.totalorder %s22, 0
      %p89 = por %p87, %p88
      %p90 = scmp.ne.s32.totalorder %s82, %s84
      %p91 = scmp.eq.s32.totalorder %s27, 1
      %p92 = por %p90, %p91
      %p93 = scmp.ne.s32.totalorder %s84, %s85
      %p94 = scmp.eq.s32.totalorder %s27, 0
      %p95 = por %p93, %p94
      %p96 = scmp.ne.s32.totalorder %s84, %s85
      %p97 = scmp.eq.s32.totalorder %s28, 1
      %p98 = por %p96, %p97
      %p100 = scmp.ne.s32.totalorder %s85, %s99
      %p101 = scmp.eq.s32.totalorder %s28, 0
      %p102 = por %p100, %p101
      %s104 = sadd.s32 %s103, 1
      %p107 = scmp.eq.s32.totalorder %s22, 1
      %p108 = scmp.ne.s32.totalorder %s103, %s105
      %p109 = scmp.eq.s32.totalorder %s22, 0
      %p110 = por %p108, %p109
      %p111 = scmp.ne.s32.totalorder %s103, %s105
      %p112 = scmp.eq.s32.totalorder %s27, 1
      %p113 = por %p111, %p112
      %p114 = scmp.ne.s32.totalorder %s105, %s106
      %p115 = scmp.eq.s32.totalorder %s27, 0
      %p116 = por %p114, %p115
      %p117 = scmp.ne.s32.totalorder %s105, %s106
      %p118 = scmp.eq.s32.totalorder %s28, 1
      %p119 = por %p117, %p118
      %p121 = scmp.ne.s32.totalorder %s106, %s120
      %p122 = scmp.eq.s32.totalorder %s28, 0
      %p123 = por %p121, %p122
      %s125 = sadd.s32 %s124, 1
      %p128 = scmp.eq.s32.totalorder %s22, 1
      %p129 = scmp.ne.s32.totalorder %s124, %s126
      %p130 = scmp.eq.s32.totalorder %s22, 0
      %p131 = por %p129, %p130
      %p132 = scmp.ne.s32.totalorder %s124, %s126
      %p133 = scmp.eq.s32.totalorder %s27, 1
      %p134 = por %p132, %p133
      %p135 = scmp.ne.s32.totalorder %s126, %s127
      %p136 = scmp.eq.s32.totalorder %s27, 0
      %p137 = por %p135, %p136
      %p138 = scmp.ne.s32.totalorder %s126, %s127
      %p139 = scmp.eq.s32.totalorder %s28, 1
      %p140 = por %p138, %p139
      %p142 = scmp.ne.s32.totalorder %s127, %s141
      %p143 = scmp.eq.s32.totalorder %s28, 0
      %p144 = por %p142, %p143
      %s146 = sadd.s32 %s145, 1
      %p149 = scmp.eq.s32.totalorder %s22, 1
      %p150 = scmp.ne.s32.totalorder %s145, %s147
      %p151 = scmp.eq.s32.totalorder %s22, 0
      %p152 = por %p150, %p151
      %p153 = scmp.ne.s32.totalorder %s145, %s147
      %p154 = scmp.eq.s32.totalorder %s27, 1
      %p155 = por %p153, %p154
      %p156 = scmp.ne.s32.totalorder %s147, %s148
      %p157 = scmp.eq.s32.totalorder %s27, 0
      %p158 = por %p156, %p157
      %p159 = scmp.ne.s32.totalorder %s147, %s148
      %p160 = scmp.eq.s32.totalorder %s28, 1
      %p161 = por %p159, %p160
      %p163 = scmp.ne.s32.totalorder %s148, %s162
      %p164 = scmp.eq.s32.totalorder %s28, 0
      %p165 = por %p163, %p164
      %s167 = sadd.s32 %s166, 1
      %p170 = scmp.eq.s32.totalorder %s22, 1
      %p171 = scmp.ne.s32.totalorder %s166, %s168
      %p172 = scmp.eq.s32.totalorder %s22, 0
      %p173 = por %p171, %p172
      %p174 = scmp.ne.s32.totalorder %s166, %s168
      %p175 = scmp.eq.s32.totalorder %s27, 1
      %p176 = por %p174, %p175
      %p177 = scmp.ne.s32.totalorder %s168, %s169
      %p178 = scmp.eq.s32.totalorder %s27, 0
      %p179 = por %p177, %p178
      %p180 = scmp.ne.s32.totalorder %s168, %s169
      %p181 = scmp.eq.s32.totalorder %s28, 1
      %p182 = por %p180, %p181
      %p184 = scmp.ne.s32.totalorder %s169, %s183
      %p185 = scmp.eq.s32.totalorder %s28, 0
      %p186 = por %p184, %p185
      %s188 = sadd.s32 %s187, 1
      %p191 = scmp.eq.s32.totalorder %s22, 1
      %p192 = scmp.ne.s32.totalorder %s187, %s189
      %p193 = scmp.eq.s32.totalorder %s22, 0
      %p194 = por %p192, %p193
      %p195 = scmp.ne.s32.totalorder %s187, %s189
      %p196 = scmp.eq.s32.totalorder %s27, 1
      %p197 = por %p195, %p196
      %p198 = scmp.ne.s32.totalorder %s189, %s190
      %p199 = scmp.eq.s32.totalorder %s27, 0
      %p200 = por %p198, %p199
      %p201 = scmp.ne.s32.totalorder %s189, %s190
      %p202 = scmp.eq.s32.totalorder %s28, 1
      %p203 = por %p201, %p202
      %p205 = scmp.ne.s32.totalorder %s190, %s204
      %p206 = scmp.eq.s32.totalorder %s28, 0
      %p207 = por %p205, %p206
      %s208 = ssub.s32 %s22, %s29
      %p209 = scmp.eq.s32.totalorder %s208, 0
      %s211 = sadd.s32 %s210, 1
      %s212 = scalar_select %p209, %s210, %s211
      %p215 = pneg %p209
      %p216 = scmp.eq.s32.totalorder %s22, 1
      %p217 = por %p215, %p216
      %p218 = scmp.ne.s32.totalorder %s210, %s213
      %p219 = scmp.eq.s32.totalorder %s22, 0
      %p220 = por %p218, %p219
      %p221 = scmp.ne.s32.totalorder %s210, %s213
      %p222 = scmp.eq.s32.totalorder %s27, 1
      %p223 = por %p221, %p222
      %p224 = scmp.ne.s32.totalorder %s213, %s214
      %p225 = scmp.eq.s32.totalorder %s27, 0
      %p226 = por %p224, %p225
      %p227 = scmp.ne.s32.totalorder %s213, %s214
      %p228 = scmp.eq.s32.totalorder %s28, 1
      %p229 = por %p227, %p228
      %p231 = scmp.ne.s32.totalorder %s214, %s230
      %p232 = scmp.eq.s32.totalorder %s28, 0
      %p233 = por %p231, %p232
      %p234 = scmp.le.s32.totalorder 1, %s22
      %p235 = scmp.lt.s32.totalorder %s22, 3
      %p236 = pnand %p234, %p235
      %p237 = pneg %p236
      // Predicated region
      $region9: #{tpu_custom_call.1} parent=5 // pred_check
        _
      $region10: #{tpu_custom_call.1} parent=5 // pred_check_branch
        %239 = sbr.rel (%p236) target = $region12
      $region11: #{tpu_custom_call.1} parent=5 // pred_region
        %s240 = ssub.s32 %s22, 1
        // Predicated region
        $region13: #{tpu_custom_call.1} parent=11 // pred_check
          %p241 = pneg %p95
        $region14: #{tpu_custom_call.1} parent=11 // pred_check_branch
          %243 = sbr.rel (%p241) target = $region16
        $region15: #{tpu_custom_call.1} parent=11 // pred_region
          %s245 = ssub.s32 896, 896
          %246 = vsyncadd [#allocation6], %s245
          %s247 = sshll.u32 [#allocation5], 4
          %s248 = int_to_ptr.vmem [resolvable:$true] %s247
          %253 = dma.hbm_to_vmem [thread:$0]  %s2, 896, %s248, [#allocation6], 128, 128, 8
        $region16: #{tpu_custom_call.1} parent=11 // pred_fallthru
          _
        // Predicated region
        $region17: #{tpu_custom_call.1} parent=11 // pred_check
          %p254 = pneg %p116
        $region18: #{tpu_custom_call.1} parent=11 // pred_check_branch
          %256 = sbr.rel (%p254) target = $region20
        $region19: #{tpu_custom_call.1} parent=11 // pred_region
          %s258 = ssub.s32 6144, 6144
          %259 = vsyncadd [#allocation6], %s258
          %s260 = sshll.u32 [#allocation7], 4
          %s261 = int_to_ptr.vmem [resolvable:$true] %s260
          %266 = dma.hbm_to_vmem [thread:$0]  %s3, 6144, %s261, [#allocation6], 128, 128, 8
        $region20: #{tpu_custom_call.1} parent=11 // pred_fallthru
          _
        // Predicated region
        $region21: #{tpu_custom_call.1} parent=11 // pred_check
          %p267 = pneg %p137
        $region22: #{tpu_custom_call.1} parent=11 // pred_check_branch
          %269 = sbr.rel (%p267) target = $region24
        $region23: #{tpu_custom_call.1} parent=11 // pred_region
          _
        $region24: #{tpu_custom_call.1} parent=11 // pred_fallthru
          _
        // Predicated region
        $region25: #{tpu_custom_call.1} parent=11 // pred_check
          %p270 = pneg %p158
        $region26: #{tpu_custom_call.1} parent=11 // pred_check_branch
          %272 = sbr.rel (%p270) target = $region28
        $region27: #{tpu_custom_call.1} parent=11 // pred_region
          %s274 = ssub.s32 6144, 6144
          %275 = vsyncadd [#allocation9], %s274
          %s276 = sshll.u32 [#allocation8], 4
          %s277 = int_to_ptr.vmem [resolvable:$true] %s276
          %282 = dma.hbm_to_vmem [thread:$0]  %s5, 6144, %s277, [#allocation9], 128, 128, 8
        $region28: #{tpu_custom_call.1} parent=11 // pred_fallthru
          _
        // Predicated region
        $region29: #{tpu_custom_call.1} parent=11 // pred_check
          %p283 = pneg %p179
        $region30: #{tpu_custom_call.1} parent=11 // pred_check_branch
          %285 = sbr.rel (%p283) target = $region32
        $region31: #{tpu_custom_call.1} parent=11 // pred_region
          _
        $region32: #{tpu_custom_call.1} parent=11 // pred_fallthru
          _
        // Predicated region
        $region33: #{tpu_custom_call.1} parent=11 // pred_check
          %p286 = pneg %p200
        $region34: #{tpu_custom_call.1} parent=11 // pred_check_branch
          %288 = sbr.rel (%p286) target = $region36
        $region35: #{tpu_custom_call.1} parent=11 // pred_region
          _
        $region36: #{tpu_custom_call.1} parent=11 // pred_fallthru
          _
      $region12: #{tpu_custom_call.1} parent=5 // pred_fallthru
        _
      %p289 = scmp.lt.s32.totalorder %s22, 2
      // Predicated region
      $region37: #{tpu_custom_call.1} parent=5 // pred_check
        %p290 = pneg %p289
      $region38: #{tpu_custom_call.1} parent=5 // pred_check_branch
        %292 = sbr.rel (%p290) target = $region40
      $region39: #{tpu_custom_call.1} parent=5 // pred_region
        // Predicated region
        $region41: #{tpu_custom_call.1} parent=39 // pred_check
          %p293 = pneg %p42
        $region42: #{tpu_custom_call.1} parent=39 // pred_check_branch
          %295 = sbr.rel (%p293) target = $region44
        $region43: #{tpu_custom_call.1} parent=39 // pred_region
          %s296 = smul.u32 4, %s22
          %p297 = scmp.lt.s32.totalorder %s296, 7
          %s298 = scalar_select %p297, %s296, 7
          %s299 = smul.addr %s298, 8
          %s300 = scalar_lea.vmem %s0, %s299
          %s301 = smul.u32 4, %s22
        $region44: #{tpu_custom_call.1} parent=39 // pred_fallthru
          _
        // Predicated region
        $region45: #{tpu_custom_call.1} parent=39 // pred_check
          %p302 = pneg %p68
        $region46: #{tpu_custom_call.1} parent=39 // pred_check_branch
          %304 = sbr.rel (%p302) target = $region48
        $region47: #{tpu_custom_call.1} parent=39 // pred_region
          %s305 = sand.u32 %s58, 1
          %s306 = scalar_lea.sflag [#allocation3], %s305
          %s307 = sand.u32 %s58, 1
          %s308 = smul.addr %s307, 32
          %s309 = scalar_lea.vmem [#allocation2], %s308
          %s310 = smul.u32 4, %s22
          %s312 = ssub.s32 512, 512
          %313 = vsyncadd %s306, %s312
          %s314 = smul.addr %s310, 128
          %s315 = scalar_lea.hbm %s1, %s314
          %s316 = sshll.u32 %s309, 4
          %s317 = int_to_ptr.vmem [resolvable:$true] %s316
          %322 = dma.hbm_to_vmem [thread:$0]  %s315, 512, %s317, %s306, 128, 128, 8
        $region48: #{tpu_custom_call.1} parent=39 // pred_fallthru
          _
      $region40: #{tpu_custom_call.1} parent=5 // pred_fallthru
        _
      %p323 = scmp.le.s32.totalorder 1, %s22
      %p324 = scmp.lt.s32.totalorder %s22, 3
      %p325 = pnand %p323, %p324
      %p326 = pneg %p325
      // Predicated region
      $region49: #{tpu_custom_call.1} parent=5 // pred_check
        _
      $region50: #{tpu_custom_call.1} parent=5 // pred_check_branch
        %328 = sbr.rel (%p325) target = $region52
      $region51: #{tpu_custom_call.1} parent=5 // pred_region
        %s329 = ssub.s32 %s22, 1
        %s330 = sand.u32 %s61, 1
        %s331 = scalar_lea.sflag [#allocation3], %s330
        %s332 = sand.u32 %s61, 1
        %s333 = smul.addr %s332, 32
        %s334 = scalar_lea.vmem [#allocation2], %s333
        // Predicated region
        $region53: #{tpu_custom_call.1} parent=51 // pred_check
          %p335 = pneg %p74
        $region54: #{tpu_custom_call.1} parent=51 // pred_check_branch
          %337 = sbr.rel (%p335) target = $region56
        $region55: #{tpu_custom_call.1} parent=51 // pred_region
          %338 = dma.done %s331, 512
        $region56: #{tpu_custom_call.1} parent=51 // pred_fallthru
          _
        // Predicated region
        $region57: #{tpu_custom_call.1} parent=51 // pred_check
          %p339 = pneg %p95
        $region58: #{tpu_custom_call.1} parent=51 // pred_check_branch
          %341 = sbr.rel (%p339) target = $region60
        $region59: #{tpu_custom_call.1} parent=51 // pred_region
          %342 = dma.done [#allocation6], 896
        $region60: #{tpu_custom_call.1} parent=51 // pred_fallthru
          _
        // Predicated region
        $region61: #{tpu_custom_call.1} parent=51 // pred_check
          %p343 = pneg %p116
        $region62: #{tpu_custom_call.1} parent=51 // pred_check_branch
          %345 = sbr.rel (%p343) target = $region64
        $region63: #{tpu_custom_call.1} parent=51 // pred_region
          %346 = dma.done [#allocation6], 6144
        $region64: #{tpu_custom_call.1} parent=51 // pred_fallthru
          _
        // Predicated region
        $region65: #{tpu_custom_call.1} parent=51 // pred_check
          %p347 = pneg %p158
        $region66: #{tpu_custom_call.1} parent=51 // pred_check_branch
          %349 = sbr.rel (%p347) target = $region68
        $region67: #{tpu_custom_call.1} parent=51 // pred_region
          %350 = dma.done [#allocation9], 6144
        $region68: #{tpu_custom_call.1} parent=51 // pred_fallthru
          _
        %s351 = smul.u32 4, %s27
        %p352 = scmp.lt.s32.totalorder %s351, 7
        %s353 = scalar_select %p352, %s351, 7
        %s354 = smul.addr %s353, 8
        %s355 = scalar_lea.vmem %s0, %s354
        %p356 = pneg %p48
        %p357 = pneg %p45
        %s358 = sand.u32 %s61, 1
        %s359 = scalar_lea.sflag [#allocation3], %s358
        %s360 = sand.u32 %s61, 1
        %s361 = smul.addr %s360, 32
        %s362 = scalar_lea.vmem [#allocation2], %s361
        %p363 = pneg %p74
        %p364 = pneg %p71
        %p365 = pneg %p95
        %p366 = pneg %p92
        %p367 = pneg %p116
        %p368 = pneg %p113
        %p369 = pneg %p137
        %p370 = pneg %p134
        %p371 = pneg %p158
        %p372 = pneg %p155
        %p373 = pneg %p179
        %p374 = pneg %p176
        %p375 = pneg %p200
        %p376 = pneg %p197
        %p377 = pneg %p226
        %p378 = pneg %p223
        %s379 = sand.u32 %s213, 1
        %s380 = scalar_lea.sflag [#allocation4], %s379
        %s381 = sand.u32 %s213, 1
        %s382 = smul.addr %s381, 32
        %s383 = scalar_lea.vmem [#allocation10], %s382
        %s384 = smul.u32 4, %s27
        %p385 = scmp.lt.s32.totalorder %s384, 7
        %s386 = scalar_select %p385, %s384, 7
        %s387 = smul.addr %s386, 8
        %s388 = scalar_lea.vmem %s0, %s387
        %s389 = smul.u32 4, %s27
        %s390 = smul.u32 4, %s27
        %s391 = smul.u32 4, %s27
        %v392 = vld [vmem:[%s388] sm:$0xff]
        %v393 = vld [vmem:[%s388 + $0x8] sm:$0xff]
        %v394 = vld [vmem:[%s388 + $0x10] sm:$0xff]
        %v395 = vld [vmem:[%s388 + $0x18] sm:$0xff]
        %v396 = vld [vmem:[#allocation5] sm:$0xff]
        %v397 = vld [vmem:[#allocation5 + $0x8] sm:$0xff]
        %v398 = vld [vmem:[#allocation5 + $0x10] sm:$0xff]
        %v399 = vld [vmem:[#allocation5 + $0x18] sm:$0xff]
        %v400 = vld [vmem:[#allocation5 + $0x20] sm:$0xff]
        %v401 = vld [vmem:[#allocation5 + $0x28] sm:$0xff]
        %v402 = vld [vmem:[#allocation5 + $0x30] sm:$0xff]
        %vm403 = vcmask 457728
        %v405 = vsel %vm403, %v392, 0
        %v408 = vsel %vm403, %v393, 0
        %v411 = vsel %vm403, %v394, 0
        %v414 = vsel %vm403, %v395, 0
        %416 = vmatprep.subr.mxu0 0.0
        %417 = vmatpush1.msra.mxu0 %v396
        %418 = vmatprep.subr.mxu0 0.0
        %419 = vmatpush1.msra.mxu0 %v397
        %420 = vmatprep.subr.mxu0 0.0
        %421 = vmatpush1.msra.mxu0 %v398
        %422 = vmatprep.subr.mxu0 0.0
        %423 = vmatpush1.msra.mxu0 %v399
        %424 = vmatprep.subr.mxu0 0.0
        %425 = vmatpush1.msra.mxu0 %v400
        %426 = vmatprep.subr.mxu0 0.0
        %427 = vmatpush1.msra.mxu0 %v401
        %428 = vmatprep.subr.mxu0 0.0
        %429 = vmatpush1.msra.mxu0 %v402
        %430 = vmatprep.subr.mxu0 0.0
        %431 = vmatpush1.msra.mxu0 0.0
        %432 = vmatprep.subr.mxu0 0.0
        %433 = vmatpush1.msra.mxu0 0.0
        %434 = vmatprep.subr.mxu0 0.0
        %435 = vmatpush1.msra.mxu0 0.0
        %436 = vmatprep.subr.mxu0 0.0
        %437 = vmatpush1.msra.mxu0 0.0
        %438 = vmatprep.subr.mxu0 0.0
        %439 = vmatpush1.msra.mxu0 0.0
        %440 = vmatprep.subr.mxu0 0.0
        %441 = vmatpush1.msra.mxu0 0.0
        %442 = vmatprep.subr.mxu0 0.0
        %443 = vmatpush1.msra.mxu0 0.0
        %444 = vmatprep.subr.mxu0 0.0
        %445 = vmatpush1.msra.mxu0 0.0
        %446 = vmatprep.subr.mxu0 0.0
        %447 = vmatpush1.msra.mxu0 0.0
        %448 = vmatprep.subr.mxu0 0.0
        %449 = vmatpush1.msra.mxu0 0.0
        %450 = vmatprep.subr.mxu0 0.0
        %451 = vmatpush1.msra.mxu0 0.0
        %452 = vmatprep.subr.mxu0 0.0
        %453 = vmatpush1.msra.mxu0 0.0
        %454 = vmatprep.subr.mxu0 0.0
        %455 = vmatpush1.msra.mxu0 0.0
        %456 = vmatprep.subr.mxu0 0.0
        %457 = vmatpush1.msra.mxu0 0.0
        %458 = vmatprep.subr.mxu0 0.0
        %459 = vmatpush1.msra.mxu0 0.0
        %460 = vmatprep.subr.mxu0 0.0
        %461 = vmatpush1.msra.mxu0 0.0
        %462 = vmatprep.subr.mxu0 0.0
        %463 = vmatpush1.msra.mxu0 0.0
        %464 = vmatprep.subr.mxu0 0.0
        %465 = vmatpush1.msra.mxu0 0.0
        %466 = vmatprep.subr.mxu0 0.0
        %467 = vmatpush1.msra.mxu0 0.0
        %468 = vmatprep.subr.mxu0 0.0
        %469 = vmatpush1.msra.mxu0 0.0
        %470 = vmatprep.subr.mxu0 0.0
        %471 = vmatpush1.msra.mxu0 0.0
        %472 = vmatprep.subr.mxu0 0.0
        %473 = vmatpush1.msra.mxu0 0.0
        %474 = vmatprep.subr.mxu0 0.0
        %475 = vmatpush1.msra.mxu0 0.0
        %476 = vmatprep.subr.mxu0 0.0
        %477 = vmatpush1.msra.mxu0 0.0
        %478 = vmatprep.subr.mxu0 0.0
        %479 = vmatpush1.msra.mxu0 0.0
        %480 = vmatprep.mubr.f32.mxu0 0.0
        %481 = vmatmul.mubr.f32.gmra.mrb[0].mxu0 %v405
        %v482 = vpop.f32.mrb[0].mxu0
        %v483 = vadd.f32 0.0, %v482
        %v484 = vpop.f32.mrb[0].mxu0
        %485 = vmatprep.mubr.f32.mxu0 0.0
        %486 = vmatmul.mubr.f32.gmra.mrb[0].mxu0 %v408
        %v487 = vpop.f32.mrb[0].mxu0
        %v488 = vadd.f32 0.0, %v487
        %v489 = vpop.f32.mrb[0].mxu0
        %490 = vmatprep.mubr.f32.mxu0 0.0
        %491 = vmatmul.mubr.f32.gmra.mrb[0].mxu0 %v411
        %v492 = vpop.f32.mrb[0].mxu0
        %v493 = vadd.f32 0.0, %v492
        %v494 = vpop.f32.mrb[0].mxu0
        %495 = vmatprep.mubr.f32.mxu0 0.0
        %496 = vmatmul.mubr.f32.gmra.mrb[0].mxu0 %v414
        %v497 = vpop.f32.mrb[0].mxu0
        %v498 = vadd.f32 0.0, %v497
        %v499 = vpop.f32.mrb[0].mxu0
        %500 = vdwg.mxu0
        %v501 = vmax.f32 %v483, 0.0
        %v502 = vmax.f32 %v488, 0.0
        %v503 = vmax.f32 %v493, 0.0
        %v504 = vmax.f32 %v498, 0.0
        %v505 = vld [vmem:[%s334] sm:$0xff]
        %v506 = vld [vmem:[%s334 + $0x8] sm:$0xff]
        %v507 = vld [vmem:[%s334 + $0x10] sm:$0xff]
        %v508 = vld [vmem:[%s334 + $0x18] sm:$0xff]
        %v509 = vadd.f32 %v501, %v505
        %v510 = vadd.f32 %v502, %v506
        %v511 = vadd.f32 %v503, %v507
        %v512 = vadd.f32 %v504, %v508
        %v513 = vld [vmem:[%s4] sm:$0x1]
        %v514 = vld [vmem:[#allocation7] sm:$0xff]
        %v515 = vld [vmem:[#allocation7 + $0x8] sm:$0xff]
        %v516 = vld [vmem:[#allocation7 + $0x10] sm:$0xff]
        %v517 = vld [vmem:[#allocation7 + $0x18] sm:$0xff]
        %v518 = vld [vmem:[#allocation7 + $0x20] sm:$0xff]
        %v519 = vld [vmem:[#allocation7 + $0x28] sm:$0xff]
        %v520 = vld [vmem:[#allocation7 + $0x30] sm:$0xff]
        %v521 = vld [vmem:[#allocation7 + $0x38] sm:$0xff]
        %v522 = vld [vmem:[#allocation7 + $0x40] sm:$0xff]
        %v523 = vld [vmem:[#allocation7 + $0x48] sm:$0xff]
        %v524 = vld [vmem:[#allocation7 + $0x50] sm:$0xff]
        %v525 = vld [vmem:[#allocation7 + $0x58] sm:$0xff]
        %v526 = vld [vmem:[#allocation7 + $0x60] sm:$0xff]
        %v527 = vld [vmem:[#allocation7 + $0x68] sm:$0xff]
        %v528 = vld [vmem:[#allocation7 + $0x70] sm:$0xff]
        %v529 = vld [vmem:[#allocation7 + $0x78] sm:$0xff]
        %530 = vmatprep.subr.mxu0 0.0
        %531 = vmatpush1.msra.mxu0 %v514
        %532 = vmatprep.subr.mxu0 0.0
        %533 = vmatpush1.msra.mxu0 %v515
        %534 = vmatprep.subr.mxu0 0.0
        %535 = vmatpush1.msra.mxu0 %v516
        %536 = vmatprep.subr.mxu0 0.0
        %537 = vmatpush1.msra.mxu0 %v517
        %538 = vmatprep.subr.mxu0 0.0
        %539 = vmatpush1.msra.mxu0 %v518
        %540 = vmatprep.subr.mxu0 0.0
        %541 = vmatpush1.msra.mxu0 %v519
        %542 = vmatprep.subr.mxu0 0.0
        %543 = vmatpush1.msra.mxu0 %v520
        %544 = vmatprep.subr.mxu0 0.0
        %545 = vmatpush1.msra.mxu0 %v521
        %546 = vmatprep.subr.mxu0 0.0
        %547 = vmatpush1.msra.mxu0 %v522
        %548 = vmatprep.subr.mxu0 0.0
        %549 = vmatpush1.msra.mxu0 %v523
        %550 = vmatprep.subr.mxu0 0.0
        %551 = vmatpush1.msra.mxu0 %v524
        %552 = vmatprep.subr.mxu0 0.0
        %553 = vmatpush1.msra.mxu0 %v525
        %554 = vmatprep.subr.mxu0 0.0
        %555 = vmatpush1.msra.mxu0 %v526
        %556 = vmatprep.subr.mxu0 0.0
        %557 = vmatpush1.msra.mxu0 %v527
        %558 = vmatprep.subr.mxu0 0.0
        %559 = vmatpush1.msra.mxu0 %v528
        %560 = vmatprep.subr.mxu0 0.0
        %561 = vmatpush1.msra.mxu0 %v529
        %562 = vmatprep.subr.mxu0 0.0
        %563 = vmatpush1.msra.mxu0 0.0
        %564 = vmatprep.subr.mxu0 0.0
        %565 = vmatpush1.msra.mxu0 0.0
        %566 = vmatprep.subr.mxu0 0.0
        %567 = vmatpush1.msra.mxu0 0.0
        %568 = vmatprep.subr.mxu0 0.0
        %569 = vmatpush1.msra.mxu0 0.0
        %570 = vmatprep.subr.mxu0 0.0
        %571 = vmatpush1.msra.mxu0 0.0
        %572 = vmatprep.subr.mxu0 0.0
        %573 = vmatpush1.msra.mxu0 0.0
        %574 = vmatprep.subr.mxu0 0.0
        %575 = vmatpush1.msra.mxu0 0.0
        %576 = vmatprep.subr.mxu0 0.0
        %577 = vmatpush1.msra.mxu0 0.0
        %578 = vmatprep.subr.mxu0 0.0
        %579 = vmatpush1.msra.mxu0 0.0
        %580 = vmatprep.subr.mxu0 0.0
        %581 = vmatpush1.msra.mxu0 0.0
        %582 = vmatprep.subr.mxu0 0.0
        %583 = vmatpush1.msra.mxu0 0.0
        %584 = vmatprep.subr.mxu0 0.0
        %585 = vmatpush1.msra.mxu0 0.0
        %586 = vmatprep.subr.mxu0 0.0
        %587 = vmatpush1.msra.mxu0 0.0
        %588 = vmatprep.subr.mxu0 0.0
        %589 = vmatpush1.msra.mxu0 0.0
        %590 = vmatprep.subr.mxu0 0.0
        %591 = vmatpush1.msra.mxu0 0.0
        %592 = vmatprep.subr.mxu0 0.0
        %593 = vmatpush1.msra.mxu0 0.0
        %594 = vmatprep.mubr.f32.mxu0 0.0
        %595 = vmatmul.mubr.f32.gmra.mrb[0].mxu0 %v509
        %v596 = vpop.f32.mrb[0].mxu0
        %v597 = vadd.f32 0.0, %v596
        %v598 = vpop.f32.mrb[0].mxu0
        %599 = vmatprep.mubr.f32.mxu0 0.0
        %600 = vmatmul.mubr.f32.gmra.mrb[0].mxu0 %v510
        %v601 = vpop.f32.mrb[0].mxu0
        %v602 = vadd.f32 0.0, %v601
        %v603 = vpop.f32.mrb[0].mxu0
        %604 = vmatprep.mubr.f32.mxu0 0.0
        %605 = vmatmul.mubr.f32.gmra.mrb[0].mxu0 %v511
        %v606 = vpop.f32.mrb[0].mxu0
        %v607 = vadd.f32 0.0, %v606
        %v608 = vpop.f32.mrb[0].mxu0
        %609 = vmatprep.mubr.f32.mxu0 0.0
        %610 = vmatmul.mubr.f32.gmra.mrb[0].mxu0 %v512
        %v611 = vpop.f32.mrb[0].mxu0
        %v612 = vadd.f32 0.0, %v611
        %v613 = vpop.f32.mrb[0].mxu0
        %614 = vdwg.mxu0
        %v616 = vlaneseq
        %v617 = vshrl.u32 %v616, 7
        %v618 = vsub.s32 0, %v617
        %v619 = vrot.slane %v513, %v618
        %v621 = vadd.f32 %v619, %v597
        %v622 = vadd.f32 %v619, %v602
        %v623 = vadd.f32 %v619, %v607
        %v624 = vadd.f32 %v619, %v612
        %s625 = scalar_lea.vmem [#allocation7], 128
        %v626 = vld [vmem:[%s625] sm:$0xff]
        %v627 = vld [vmem:[%s625 + $0x8] sm:$0xff]
        %v628 = vld [vmem:[%s625 + $0x10] sm:$0xff]
        %v629 = vld [vmem:[%s625 + $0x18] sm:$0xff]
        %v630 = vld [vmem:[%s625 + $0x20] sm:$0xff]
        %v631 = vld [vmem:[%s625 + $0x28] sm:$0xff]
        %v632 = vld [vmem:[%s625 + $0x30] sm:$0xff]
        %v633 = vld [vmem:[%s625 + $0x38] sm:$0xff]
        %v634 = vld [vmem:[%s625 + $0x40] sm:$0xff]
        %v635 = vld [vmem:[%s625 + $0x48] sm:$0xff]
        %v636 = vld [vmem:[%s625 + $0x50] sm:$0xff]
        %v637 = vld [vmem:[%s625 + $0x58] sm:$0xff]
        %v638 = vld [vmem:[%s625 + $0x60] sm:$0xff]
        %v639 = vld [vmem:[%s625 + $0x68] sm:$0xff]
        %v640 = vld [vmem:[%s625 + $0x70] sm:$0xff]
        %v641 = vld [vmem:[%s625 + $0x78] sm:$0xff]
        %vm646 = vcmask 1046528
        %v647 = vrot.slane %v509, 1
        %v648 = vrot.slane %v510, 1
        %v649 = vsel %vm646, %v647, %v648
        %v650 = vrot.slane %v511, 1
        %v651 = vsel %vm646, %v648, %v650
        %v652 = vrot.slane %v512, 1
        %v653 = vsel %vm646, %v650, %v652
        %658 = vmatprep.subr.mxu0 0.0
        %659 = vmatpush1.msra.mxu0 %v626
        %660 = vmatprep.subr.mxu0 0.0
        %661 = vmatpush1.msra.mxu0 %v627
        %662 = vmatprep.subr.mxu0 0.0
        %663 = vmatpush1.msra.mxu0 %v628
        %664 = vmatprep.subr.mxu0 0.0
        %665 = vmatpush1.msra.mxu0 %v629
        %666 = vmatprep.subr.mxu0 0.0
        %667 = vmatpush1.msra.mxu0 %v630
        %668 = vmatprep.subr.mxu0 0.0
        %669 = vmatpush1.msra.mxu0 %v631
        %670 = vmatprep.subr.mxu0 0.0
        %671 = vmatpush1.msra.mxu0 %v632
        %672 = vmatprep.subr.mxu0 0.0
        %673 = vmatpush1.msra.mxu0 %v633
        %674 = vmatprep.subr.mxu0 0.0
        %675 = vmatpush1.msra.mxu0 %v634
        %676 = vmatprep.subr.mxu0 0.0
        %677 = vmatpush1.msra.mxu0 %v635
        %678 = vmatprep.subr.mxu0 0.0
        %679 = vmatpush1.msra.mxu0 %v636
        %680 = vmatprep.subr.mxu0 0.0
        %681 = vmatpush1.msra.mxu0 %v637
        %682 = vmatprep.subr.mxu0 0.0
        %683 = vmatpush1.msra.mxu0 %v638
        %684 = vmatprep.subr.mxu0 0.0
        %685 = vmatpush1.msra.mxu0 %v639
        %686 = vmatprep.subr.mxu0 0.0
        %687 = vmatpush1.msra.mxu0 %v640
        %688 = vmatprep.subr.mxu0 0.0
        %689 = vmatpush1.msra.mxu0 %v641
        %690 = vmatprep.subr.mxu0 0.0
        %691 = vmatpush1.msra.mxu0 0.0
        %692 = vmatprep.subr.mxu0 0.0
        %693 = vmatpush1.msra.mxu0 0.0
        %694 = vmatprep.subr.mxu0 0.0
        %695 = vmatpush1.msra.mxu0 0.0
        %696 = vmatprep.subr.mxu0 0.0
        %697 = vmatpush1.msra.mxu0 0.0
        %698 = vmatprep.subr.mxu0 0.0
        %699 = vmatpush1.msra.mxu0 0.0
        %700 = vmatprep.subr.mxu0 0.0
        %701 = vmatpush1.msra.mxu0 0.0
        %702 = vmatprep.subr.mxu0 0.0
        %703 = vmatpush1.msra.mxu0 0.0
        %704 = vmatprep.subr.mxu0 0.0
        %705 = vmatpush1.msra.mxu0 0.0
        %706 = vmatprep.subr.mxu0 0.0
        %707 = vmatpush1.msra.mxu0 0.0
        %708 = vmatprep.subr.mxu0 0.0
        %709 = vmatpush1.msra.mxu0 0.0
        %710 = vmatprep.subr.mxu0 0.0
        %711 = vmatpush1.msra.mxu0 0.0
        %712 = vmatprep.subr.mxu0 0.0
        %713 = vmatpush1.msra.mxu0 0.0
        %714 = vmatprep.subr.mxu0 0.0
        %715 = vmatpush1.msra.mxu0 0.0
        %716 = vmatprep.subr.mxu0 0.0
        %717 = vmatpush1.msra.mxu0 0.0
        %718 = vmatprep.subr.mxu0 0.0
        %719 = vmatpush1.msra.mxu0 0.0
        %720 = vmatprep.subr.mxu0 0.0
        %721 = vmatpush1.msra.mxu0 0.0
        %722 = vmatprep.mubr.f32.mxu0 0.0
        %723 = vmatmul.mubr.f32.gmra.mrb[0].mxu0 %v649
        %v724 = vpop.f32.mrb[0].mxu0
        %v725 = vadd.f32 0.0, %v724
        %v726 = vpop.f32.mrb[0].mxu0
        %727 = vmatprep.mubr.f32.mxu0 0.0
        %728 = vmatmul.mubr.f32.gmra.mrb[0].mxu0 %v651
        %v729 = vpop.f32.mrb[0].mxu0
        %v730 = vadd.f32 0.0, %v729
        %v731 = vpop.f32.mrb[0].mxu0
        %732 = vmatprep.mubr.f32.mxu0 0.0
        %733 = vmatmul.mubr.f32.gmra.mrb[0].mxu0 %v653
        %v734 = vpop.f32.mrb[0].mxu0
        %v735 = vadd.f32 0.0, %v734
        %v736 = vpop.f32.mrb[0].mxu0
        %737 = vmatprep.mubr.f32.mxu0 0.0
        %738 = vmatmul.mubr.f32.gmra.mrb[0].mxu0 %v652
        %v739 = vpop.f32.mrb[0].mxu0
        %v740 = vadd.f32 0.0, %v739
        %v741 = vpop.f32.mrb[0].mxu0
        %742 = vdwg.mxu0
        %v743 = vadd.f32 %v621, %v725
        %v744 = vadd.f32 %v622, %v730
        %v745 = vadd.f32 %v623, %v735
        %v746 = vadd.f32 %v624, %v740
        %s747 = scalar_lea.vmem [#allocation7], 256
        %v748 = vld [vmem:[%s747] sm:$0xff]
        %v749 = vld [vmem:[%s747 + $0x8] sm:$0xff]
        %v750 = vld [vmem:[%s747 + $0x10] sm:$0xff]
        %v751 = vld [vmem:[%s747 + $0x18] sm:$0xff]
        %v752 = vld [vmem:[%s747 + $0x20] sm:$0xff]
        %v753 = vld [vmem:[%s747 + $0x28] sm:$0xff]
        %v754 = vld [vmem:[%s747 + $0x30] sm:$0xff]
        %v755 = vld [vmem:[%s747 + $0x38] sm:$0xff]
        %v756 = vld [vmem:[%s747 + $0x40] sm:$0xff]
        %v757 = vld [vmem:[%s747 + $0x48] sm:$0xff]
        %v758 = vld [vmem:[%s747 + $0x50] sm:$0xff]
        %v759 = vld [vmem:[%s747 + $0x58] sm:$0xff]
        %v760 = vld [vmem:[%s747 + $0x60] sm:$0xff]
        %v761 = vld [vmem:[%s747 + $0x68] sm:$0xff]
        %v762 = vld [vmem:[%s747 + $0x70] sm:$0xff]
        %v763 = vld [vmem:[%s747 + $0x78] sm:$0xff]
        %vm764 = vcmask 1045504
        %v765 = vrot.slane %v509, 2
        %v766 = vrot.slane %v510, 2
        %v767 = vsel %vm764, %v765, %v766
        %v768 = vrot.slane %v511, 2
        %v769 = vsel %vm764, %v766, %v768
        %v770 = vrot.slane %v512, 2
        %v771 = vsel %vm764, %v768, %v770
        %776 = vmatprep.subr.mxu0 0.0
        %777 = vmatpush1.msra.mxu0 %v748
        %778 = vmatprep.subr.mxu0 0.0
        %779 = vmatpush1.msra.mxu0 %v749
        %780 = vmatprep.subr.mxu0 0.0
        %781 = vmatpush1.msra.mxu0 %v750
        %782 = vmatprep.subr.mxu0 0.0
        %783 = vmatpush1.msra.mxu0 %v751
        %784 = vmatprep.subr.mxu0 0.0
        %785 = vmatpush1.msra.mxu0 %v752
        %786 = vmatprep.subr.mxu0 0.0
        %787 = vmatpush1.msra.mxu0 %v753
        %788 = vmatprep.subr.mxu0 0.0
        %789 = vmatpush1.msra.mxu0 %v754
        %790 = vmatprep.subr.mxu0 0.0
        %791 = vmatpush1.msra.mxu0 %v755
        %792 = vmatprep.subr.mxu0 0.0
        %793 = vmatpush1.msra.mxu0 %v756
        %794 = vmatprep.subr.mxu0 0.0
        %795 = vmatpush1.msra.mxu0 %v757
        %796 = vmatprep.subr.mxu0 0.0
        %797 = vmatpush1.msra.mxu0 %v758
        %798 = vmatprep.subr.mxu0 0.0
        %799 = vmatpush1.msra.mxu0 %v759
        %800 = vmatprep.subr.mxu0 0.0
        %801 = vmatpush1.msra.mxu0 %v760
        %802 = vmatprep.subr.mxu0 0.0
        %803 = vmatpush1.msra.mxu0 %v761
        %804 = vmatprep.subr.mxu0 0.0
        %805 = vmatpush1.msra.mxu0 %v762
        %806 = vmatprep.subr.mxu0 0.0
        %807 = vmatpush1.msra.mxu0 %v763
        %808 = vmatprep.subr.mxu0 0.0
        %809 = vmatpush1.msra.mxu0 0.0
        %810 = vmatprep.subr.mxu0 0.0
        %811 = vmatpush1.msra.mxu0 0.0
        %812 = vmatprep.subr.mxu0 0.0
        %813 = vmatpush1.msra.mxu0 0.0
        %814 = vmatprep.subr.mxu0 0.0
        %815 = vmatpush1.msra.mxu0 0.0
        %816 = vmatprep.subr.mxu0 0.0
        %817 = vmatpush1.msra.mxu0 0.0
        %818 = vmatprep.subr.mxu0 0.0
        %819 = vmatpush1.msra.mxu0 0.0
        %820 = vmatprep.subr.mxu0 0.0
        %821 = vmatpush1.msra.mxu0 0.0
        %822 = vmatprep.subr.mxu0 0.0
        %823 = vmatpush1.msra.mxu0 0.0
        %824 = vmatprep.subr.mxu0 0.0
        %825 = vmatpush1.msra.mxu0 0.0
        %826 = vmatprep.subr.mxu0 0.0
        %827 = vmatpush1.msra.mxu0 0.0
        %828 = vmatprep.subr.mxu0 0.0
        %829 = vmatpush1.msra.mxu0 0.0
        %830 = vmatprep.subr.mxu0 0.0
        %831 = vmatpush1.msra.mxu0 0.0
        %832 = vmatprep.subr.mxu0 0.0
        %833 = vmatpush1.msra.mxu0 0.0
        %834 = vmatprep.subr.mxu0 0.0
        %835 = vmatpush1.msra.mxu0 0.0
        %836 = vmatprep.subr.mxu0 0.0
        %837 = vmatpush1.msra.mxu0 0.0
        %838 = vmatprep.subr.mxu0 0.0
        %839 = vmatpush1.msra.mxu0 0.0
        %840 = vmatprep.mubr.f32.mxu0 0.0
        %841 = vmatmul.mubr.f32.gmra.mrb[0].mxu0 %v767
        %v842 = vpop.f32.mrb[0].mxu0
        %v843 = vadd.f32 0.0, %v842
        %v844 = vpop.f32.mrb[0].mxu0
        %845 = vmatprep.mubr.f32.mxu0 0.0
        %846 = vmatmul.mubr.f32.gmra.mrb[0].mxu0 %v769
        %v847 = vpop.f32.mrb[0].mxu0
        %v848 = vadd.f32 0.0, %v847
        %v849 = vpop.f32.mrb[0].mxu0
        %850 = vmatprep.mubr.f32.mxu0 0.0
        %851 = vmatmul.mubr.f32.gmra.mrb[0].mxu0 %v771
        %v852 = vpop.f32.mrb[0].mxu0
        %v853 = vadd.f32 0.0, %v852
        %v854 = vpop.f32.mrb[0].mxu0
        %855 = vmatprep.mubr.f32.mxu0 0.0
        %856 = vmatmul.mubr.f32.gmra.mrb[0].mxu0 %v770
        %v857 = vpop.f32.mrb[0].mxu0
        %v858 = vadd.f32 0.0, %v857
        %v859 = vpop.f32.mrb[0].mxu0
        %860 = vdwg.mxu0
        %v861 = vadd.f32 %v743, %v843
        %v862 = vadd.f32 %v744, %v848
        %v863 = vadd.f32 %v745, %v853
        %v864 = vadd.f32 %v746, %v858
        %v865 = vmax.f32 %v861, 0.0
        %v866 = vmax.f32 %v862, 0.0
        %v867 = vmax.f32 %v863, 0.0
        %v868 = vmax.f32 %v864, 0.0
        %v869 = vld [vmem:[%s6] sm:$0x1]
        %v870 = vld [vmem:[#allocation8] sm:$0xff]
        %v871 = vld [vmem:[#allocation8 + $0x8] sm:$0xff]
        %v872 = vld [vmem:[#allocation8 + $0x10] sm:$0xff]
        %v873 = vld [vmem:[#allocation8 + $0x18] sm:$0xff]
        %v874 = vld [vmem:[#allocation8 + $0x20] sm:$0xff]
        %v875 = vld [vmem:[#allocation8 + $0x28] sm:$0xff]
        %v876 = vld [vmem:[#allocation8 + $0x30] sm:$0xff]
        %v877 = vld [vmem:[#allocation8 + $0x38] sm:$0xff]
        %v878 = vld [vmem:[#allocation8 + $0x40] sm:$0xff]
        %v879 = vld [vmem:[#allocation8 + $0x48] sm:$0xff]
        %v880 = vld [vmem:[#allocation8 + $0x50] sm:$0xff]
        %v881 = vld [vmem:[#allocation8 + $0x58] sm:$0xff]
        %v882 = vld [vmem:[#allocation8 + $0x60] sm:$0xff]
        %v883 = vld [vmem:[#allocation8 + $0x68] sm:$0xff]
        %v884 = vld [vmem:[#allocation8 + $0x70] sm:$0xff]
        %v885 = vld [vmem:[#allocation8 + $0x78] sm:$0xff]
        %886 = vmatprep.subr.mxu0 0.0
        %887 = vmatpush1.msra.mxu0 %v870
        %888 = vmatprep.subr.mxu0 0.0
        %889 = vmatpush1.msra.mxu0 %v871
        %890 = vmatprep.subr.mxu0 0.0
        %891 = vmatpush1.msra.mxu0 %v872
        %892 = vmatprep.subr.mxu0 0.0
        %893 = vmatpush1.msra.mxu0 %v873
        %894 = vmatprep.subr.mxu0 0.0
        %895 = vmatpush1.msra.mxu0 %v874
        %896 = vmatprep.subr.mxu0 0.0
        %897 = vmatpush1.msra.mxu0 %v875
        %898 = vmatprep.subr.mxu0 0.0
        %899 = vmatpush1.msra.mxu0 %v876
        %900 = vmatprep.subr.mxu0 0.0
        %901 = vmatpush1.msra.mxu0 %v877
        %902 = vmatprep.subr.mxu0 0.0
        %903 = vmatpush1.msra.mxu0 %v878
        %904 = vmatprep.subr.mxu0 0.0
        %905 = vmatpush1.msra.mxu0 %v879
        %906 = vmatprep.subr.mxu0 0.0
        %907 = vmatpush1.msra.mxu0 %v880
        %908 = vmatprep.subr.mxu0 0.0
        %909 = vmatpush1.msra.mxu0 %v881
        %910 = vmatprep.subr.mxu0 0.0
        %911 = vmatpush1.msra.mxu0 %v882
        %912 = vmatprep.subr.mxu0 0.0
        %913 = vmatpush1.msra.mxu0 %v883
        %914 = vmatprep.subr.mxu0 0.0
        %915 = vmatpush1.msra.mxu0 %v884
        %916 = vmatprep.subr.mxu0 0.0
        %917 = vmatpush1.msra.mxu0 %v885
        %918 = vmatprep.subr.mxu0 0.0
        %919 = vmatpush1.msra.mxu0 0.0
        %920 = vmatprep.subr.mxu0 0.0
        %921 = vmatpush1.msra.mxu0 0.0
        %922 = vmatprep.subr.mxu0 0.0
        %923 = vmatpush1.msra.mxu0 0.0
        %924 = vmatprep.subr.mxu0 0.0
        %925 = vmatpush1.msra.mxu0 0.0
        %926 = vmatprep.subr.mxu0 0.0
        %927 = vmatpush1.msra.mxu0 0.0
        %928 = vmatprep.subr.mxu0 0.0
        %929 = vmatpush1.msra.mxu0 0.0
        %930 = vmatprep.subr.mxu0 0.0
        %931 = vmatpush1.msra.mxu0 0.0
        %932 = vmatprep.subr.mxu0 0.0
        %933 = vmatpush1.msra.mxu0 0.0
        %934 = vmatprep.subr.mxu0 0.0
        %935 = vmatpush1.msra.mxu0 0.0
        %936 = vmatprep.subr.mxu0 0.0
        %937 = vmatpush1.msra.mxu0 0.0
        %938 = vmatprep.subr.mxu0 0.0
        %939 = vmatpush1.msra.mxu0 0.0
        %940 = vmatprep.subr.mxu0 0.0
        %941 = vmatpush1.msra.mxu0 0.0
        %942 = vmatprep.subr.mxu0 0.0
        %943 = vmatpush1.msra.mxu0 0.0
        %944 = vmatprep.subr.mxu0 0.0
        %945 = vmatpush1.msra.mxu0 0.0
        %946 = vmatprep.subr.mxu0 0.0
        %947 = vmatpush1.msra.mxu0 0.0
        %948 = vmatprep.subr.mxu0 0.0
        %949 = vmatpush1.msra.mxu0 0.0
        %950 = vmatprep.mubr.f32.mxu0 0.0
        %951 = vmatmul.mubr.f32.gmra.mrb[0].mxu0 %v865
        %v952 = vpop.f32.mrb[0].mxu0
        %v953 = vadd.f32 0.0, %v952
        %v954 = vpop.f32.mrb[0].mxu0
        %955 = vmatprep.mubr.f32.mxu0 0.0
        %956 = vmatmul.mubr.f32.gmra.mrb[0].mxu0 %v866
        %v957 = vpop.f32.mrb[0].mxu0
        %v958 = vadd.f32 0.0, %v957
        %v959 = vpop.f32.mrb[0].mxu0
        %960 = vmatprep.mubr.f32.mxu0 0.0
        %961 = vmatmul.mubr.f32.gmra.mrb[0].mxu0 %v867
        %v962 = vpop.f32.mrb[0].mxu0
        %v963 = vadd.f32 0.0, %v962
        %v964 = vpop.f32.mrb[0].mxu0
        %965 = vmatprep.mubr.f32.mxu0 0.0
        %966 = vmatmul.mubr.f32.gmra.mrb[0].mxu0 %v868
        %v967 = vpop.f32.mrb[0].mxu0
        %v968 = vadd.f32 0.0, %v967
        %v969 = vpop.f32.mrb[0].mxu0
        %970 = vdwg.mxu0
        %v972 = vlaneseq
        %v973 = vshrl.u32 %v972, 7
        %v974 = vsub.s32 0, %v973
        %v975 = vrot.slane %v869, %v974
        %v977 = vadd.f32 %v975, %v953
        %v978 = vadd.f32 %v975, %v958
        %v979 = vadd.f32 %v975, %v963
        %v980 = vadd.f32 %v975, %v968
        %s981 = scalar_lea.vmem [#allocation8], 128
        %v982 = vld [vmem:[%s981] sm:$0xff]
        %v983 = vld [vmem:[%s981 + $0x8] sm:$0xff]
        %v984 = vld [vmem:[%s981 + $0x10] sm:$0xff]
        %v985 = vld [vmem:[%s981 + $0x18] sm:$0xff]
        %v986 = vld [vmem:[%s981 + $0x20] sm:$0xff]
        %v987 = vld [vmem:[%s981 + $0x28] sm:$0xff]
        %v988 = vld [vmem:[%s981 + $0x30] sm:$0xff]
        %v989 = vld [vmem:[%s981 + $0x38] sm:$0xff]
        %v990 = vld [vmem:[%s981 + $0x40] sm:$0xff]
        %v991 = vld [vmem:[%s981 + $0x48] sm:$0xff]
        %v992 = vld [vmem:[%s981 + $0x50] sm:$0xff]
        %v993 = vld [vmem:[%s981 + $0x58] sm:$0xff]
        %v994 = vld [vmem:[%s981 + $0x60] sm:$0xff]
        %v995 = vld [vmem:[%s981 + $0x68] sm:$0xff]
        %v996 = vld [vmem:[%s981 + $0x70] sm:$0xff]
        %v997 = vld [vmem:[%s981 + $0x78] sm:$0xff]
        %v1002 = vrot.slane %v865, 1
        %v1003 = vrot.slane %v866, 1
        %v1004 = vsel %vm646, %v1002, %v1003
        %v1005 = vrot.slane %v867, 1
        %v1006 = vsel %vm646, %v1003, %v1005
        %v1007 = vrot.slane %v868, 1
        %v1008 = vsel %vm646, %v1005, %v1007
        %1013 = vmatprep.subr.mxu0 0.0
        %1014 = vmatpush1.msra.mxu0 %v982
        %1015 = vmatprep.subr.mxu0 0.0
        %1016 = vmatpush1.msra.mxu0 %v983
        %1017 = vmatprep.subr.mxu0 0.0
        %1018 = vmatpush1.msra.mxu0 %v984
        %1019 = vmatprep.subr.mxu0 0.0
        %1020 = vmatpush1.msra.mxu0 %v985
        %1021 = vmatprep.subr.mxu0 0.0
        %1022 = vmatpush1.msra.mxu0 %v986
        %1023 = vmatprep.subr.mxu0 0.0
        %1024 = vmatpush1.msra.mxu0 %v987
        %1025 = vmatprep.subr.mxu0 0.0
        %1026 = vmatpush1.msra.mxu0 %v988
        %1027 = vmatprep.subr.mxu0 0.0
        %1028 = vmatpush1.msra.mxu0 %v989
        %1029 = vmatprep.subr.mxu0 0.0
        %1030 = vmatpush1.msra.mxu0 %v990
        %1031 = vmatprep.subr.mxu0 0.0
        %1032 = vmatpush1.msra.mxu0 %v991
        %1033 = vmatprep.subr.mxu0 0.0
        %1034 = vmatpush1.msra.mxu0 %v992
        %1035 = vmatprep.subr.mxu0 0.0
        %1036 = vmatpush1.msra.mxu0 %v993
        %1037 = vmatprep.subr.mxu0 0.0
        %1038 = vmatpush1.msra.mxu0 %v994
        %1039 = vmatprep.subr.mxu0 0.0
        %1040 = vmatpush1.msra.mxu0 %v995
        %1041 = vmatprep.subr.mxu0 0.0
        %1042 = vmatpush1.msra.mxu0 %v996
        %1043 = vmatprep.subr.mxu0 0.0
        %1044 = vmatpush1.msra.mxu0 %v997
        %1045 = vmatprep.subr.mxu0 0.0
        %1046 = vmatpush1.msra.mxu0 0.0
        %1047 = vmatprep.subr.mxu0 0.0
        %1048 = vmatpush1.msra.mxu0 0.0
        %1049 = vmatprep.subr.mxu0 0.0
        %1050 = vmatpush1.msra.mxu0 0.0
        %1051 = vmatprep.subr.mxu0 0.0
        %1052 = vmatpush1.msra.mxu0 0.0
        %1053 = vmatprep.subr.mxu0 0.0
        %1054 = vmatpush1.msra.mxu0 0.0
        %1055 = vmatprep.subr.mxu0 0.0
        %1056 = vmatpush1.msra.mxu0 0.0
        %1057 = vmatprep.subr.mxu0 0.0
        %1058 = vmatpush1.msra.mxu0 0.0
        %1059 = vmatprep.subr.mxu0 0.0
        %1060 = vmatpush1.msra.mxu0 0.0
        %1061 = vmatprep.subr.mxu0 0.0
        %1062 = vmatpush1.msra.mxu0 0.0
        %1063 = vmatprep.subr.mxu0 0.0
        %1064 = vmatpush1.msra.mxu0 0.0
        %1065 = vmatprep.subr.mxu0 0.0
        %1066 = vmatpush1.msra.mxu0 0.0
        %1067 = vmatprep.subr.mxu0 0.0
        %1068 = vmatpush1.msra.mxu0 0.0
        %1069 = vmatprep.subr.mxu0 0.0
        %1070 = vmatpush1.msra.mxu0 0.0
        %1071 = vmatprep.subr.mxu0 0.0
        %1072 = vmatpush1.msra.mxu0 0.0
        %1073 = vmatprep.subr.mxu0 0.0
        %1074 = vmatpush1.msra.mxu0 0.0
        %1075 = vmatprep.subr.mxu0 0.0
        %1076 = vmatpush1.msra.mxu0 0.0
        %1077 = vmatprep.mubr.f32.mxu0 0.0
        %1078 = vmatmul.mubr.f32.gmra.mrb[0].mxu0 %v1004
        %v1079 = vpop.f32.mrb[0].mxu0
        %v1080 = vadd.f32 0.0, %v1079
        %v1081 = vpop.f32.mrb[0].mxu0
        %1082 = vmatprep.mubr.f32.mxu0 0.0
        %1083 = vmatmul.mubr.f32.gmra.mrb[0].mxu0 %v1006
        %v1084 = vpop.f32.mrb[0].mxu0
        %v1085 = vadd.f32 0.0, %v1084
        %v1086 = vpop.f32.mrb[0].mxu0
        %1087 = vmatprep.mubr.f32.mxu0 0.0
        %1088 = vmatmul.mubr.f32.gmra.mrb[0].mxu0 %v1008
        %v1089 = vpop.f32.mrb[0].mxu0
        %v1090 = vadd.f32 0.0, %v1089
        %v1091 = vpop.f32.mrb[0].mxu0
        %1092 = vmatprep.mubr.f32.mxu0 0.0
        %1093 = vmatmul.mubr.f32.gmra.mrb[0].mxu0 %v1007
        %v1094 = vpop.f32.mrb[0].mxu0
        %v1095 = vadd.f32 0.0, %v1094
        %v1096 = vpop.f32.mrb[0].mxu0
        %1097 = vdwg.mxu0
        %v1098 = vadd.f32 %v977, %v1080
        %v1099 = vadd.f32 %v978, %v1085
        %v1100 = vadd.f32 %v979, %v1090
        %v1101 = vadd.f32 %v980, %v1095
        %s1102 = scalar_lea.vmem [#allocation8], 256
        %v1103 = vld [vmem:[%s1102] sm:$0xff]
        %v1104 = vld [vmem:[%s1102 + $0x8] sm:$0xff]
        %v1105 = vld [vmem:[%s1102 + $0x10] sm:$0xff]
        %v1106 = vld [vmem:[%s1102 + $0x18] sm:$0xff]
        %v1107 = vld [vmem:[%s1102 + $0x20] sm:$0xff]
        %v1108 = vld [vmem:[%s1102 + $0x28] sm:$0xff]
        %v1109 = vld [vmem:[%s1102 + $0x30] sm:$0xff]
        %v1110 = vld [vmem:[%s1102 + $0x38] sm:$0xff]
        %v1111 = vld [vmem:[%s1102 + $0x40] sm:$0xff]
        %v1112 = vld [vmem:[%s1102 + $0x48] sm:$0xff]
        %v1113 = vld [vmem:[%s1102 + $0x50] sm:$0xff]
        %v1114 = vld [vmem:[%s1102 + $0x58] sm:$0xff]
        %v1115 = vld [vmem:[%s1102 + $0x60] sm:$0xff]
        %v1116 = vld [vmem:[%s1102 + $0x68] sm:$0xff]
        %v1117 = vld [vmem:[%s1102 + $0x70] sm:$0xff]
        %v1118 = vld [vmem:[%s1102 + $0x78] sm:$0xff]
        %v1119 = vrot.slane %v865, 2
        %v1120 = vrot.slane %v866, 2
        %v1121 = vsel %vm764, %v1119, %v1120
        %v1122 = vrot.slane %v867, 2
        %v1123 = vsel %vm764, %v1120, %v1122
        %v1124 = vrot.slane %v868, 2
        %v1125 = vsel %vm764, %v1122, %v1124
        %1130 = vmatprep.subr.mxu0 0.0
        %1131 = vmatpush1.msra.mxu0 %v1103
        %1132 = vmatprep.subr.mxu0 0.0
        %1133 = vmatpush1.msra.mxu0 %v1104
        %1134 = vmatprep.subr.mxu0 0.0
        %1135 = vmatpush1.msra.mxu0 %v1105
        %1136 = vmatprep.subr.mxu0 0.0
        %1137 = vmatpush1.msra.mxu0 %v1106
        %1138 = vmatprep.subr.mxu0 0.0
        %1139 = vmatpush1.msra.mxu0 %v1107
        %1140 = vmatprep.subr.mxu0 0.0
        %1141 = vmatpush1.msra.mxu0 %v1108
        %1142 = vmatprep.subr.mxu0 0.0
        %1143 = vmatpush1.msra.mxu0 %v1109
        %1144 = vmatprep.subr.mxu0 0.0
        %1145 = vmatpush1.msra.mxu0 %v1110
        %1146 = vmatprep.subr.mxu0 0.0
        %1147 = vmatpush1.msra.mxu0 %v1111
        %1148 = vmatprep.subr.mxu0 0.0
        %1149 = vmatpush1.msra.mxu0 %v1112
        %1150 = vmatprep.subr.mxu0 0.0
        %1151 = vmatpush1.msra.mxu0 %v1113
        %1152 = vmatprep.subr.mxu0 0.0
        %1153 = vmatpush1.msra.mxu0 %v1114
        %1154 = vmatprep.subr.mxu0 0.0
        %1155 = vmatpush1.msra.mxu0 %v1115
        %1156 = vmatprep.subr.mxu0 0.0
        %1157 = vmatpush1.msra.mxu0 %v1116
        %1158 = vmatprep.subr.mxu0 0.0
        %1159 = vmatpush1.msra.mxu0 %v1117
        %1160 = vmatprep.subr.mxu0 0.0
        %1161 = vmatpush1.msra.mxu0 %v1118
        %1162 = vmatprep.subr.mxu0 0.0
        %1163 = vmatpush1.msra.mxu0 0.0
        %1164 = vmatprep.subr.mxu0 0.0
        %1165 = vmatpush1.msra.mxu0 0.0
        %1166 = vmatprep.subr.mxu0 0.0
        %1167 = vmatpush1.msra.mxu0 0.0
        %1168 = vmatprep.subr.mxu0 0.0
        %1169 = vmatpush1.msra.mxu0 0.0
        %1170 = vmatprep.subr.mxu0 0.0
        %1171 = vmatpush1.msra.mxu0 0.0
        %1172 = vmatprep.subr.mxu0 0.0
        %1173 = vmatpush1.msra.mxu0 0.0
        %1174 = vmatprep.subr.mxu0 0.0
        %1175 = vmatpush1.msra.mxu0 0.0
        %1176 = vmatprep.subr.mxu0 0.0
        %1177 = vmatpush1.msra.mxu0 0.0
        %1178 = vmatprep.subr.mxu0 0.0
        %1179 = vmatpush1.msra.mxu0 0.0
        %1180 = vmatprep.subr.mxu0 0.0
        %1181 = vmatpush1.msra.mxu0 0.0
        %1182 = vmatprep.subr.mxu0 0.0
        %1183 = vmatpush1.msra.mxu0 0.0
        %1184 = vmatprep.subr.mxu0 0.0
        %1185 = vmatpush1.msra.mxu0 0.0
        %1186 = vmatprep.subr.mxu0 0.0
        %1187 = vmatpush1.msra.mxu0 0.0
        %1188 = vmatprep.subr.mxu0 0.0
        %1189 = vmatpush1.msra.mxu0 0.0
        %1190 = vmatprep.subr.mxu0 0.0
        %1191 = vmatpush1.msra.mxu0 0.0
        %1192 = vmatprep.subr.mxu0 0.0
        %1193 = vmatpush1.msra.mxu0 0.0
        %1194 = vmatprep.mubr.f32.mxu0 0.0
        %1195 = vmatmul.mubr.f32.gmra.mrb[0].mxu0 %v1121
        %v1196 = vpop.f32.mrb[0].mxu0
        %v1197 = vadd.f32 0.0, %v1196
        %v1198 = vpop.f32.mrb[0].mxu0
        %1199 = vmatprep.mubr.f32.mxu0 0.0
        %1200 = vmatmul.mubr.f32.gmra.mrb[0].mxu0 %v1123
        %v1201 = vpop.f32.mrb[0].mxu0
        %v1202 = vadd.f32 0.0, %v1201
        %v1203 = vpop.f32.mrb[0].mxu0
        %1204 = vmatprep.mubr.f32.mxu0 0.0
        %1205 = vmatmul.mubr.f32.gmra.mrb[0].mxu0 %v1125
        %v1206 = vpop.f32.mrb[0].mxu0
        %v1207 = vadd.f32 0.0, %v1206
        %v1208 = vpop.f32.mrb[0].mxu0
        %1209 = vmatprep.mubr.f32.mxu0 0.0
        %1210 = vmatmul.mubr.f32.gmra.mrb[0].mxu0 %v1124
        %v1211 = vpop.f32.mrb[0].mxu0
        %v1212 = vadd.f32 0.0, %v1211
        %v1213 = vpop.f32.mrb[0].mxu0
        %1214 = vdwg.mxu0
        %v1215 = vadd.f32 %v1098, %v1197
        %v1216 = vadd.f32 %v1099, %v1202
        %v1217 = vadd.f32 %v1100, %v1207
        %v1218 = vadd.f32 %v1101, %v1212
        %v1219 = vmax.f32 %v1215, 0.0
        %v1220 = vmax.f32 %v1216, 0.0
        %v1221 = vmax.f32 %v1217, 0.0
        %v1222 = vmax.f32 %v1218, 0.0
        %1223 = vmax.xlane.f32.xlu0 %v1219
        %v1224 = vpop.xlane.xlu0 %1223
        %1225 = vmax.xlane.f32.xlu0 %v1220
        %v1226 = vpop.xlane.xlu0 %1225
        %1227 = vmax.xlane.f32.xlu0 %v1221
        %v1228 = vpop.xlane.xlu0 %1227
        %vm1229 = vcmask 1043456
        %v1230 = vsel %vm1229, %v1222, -inf
        %1231 = vmax.xlane.f32.xlu0 %v1230
        %v1232 = vpop.xlane.xlu0 %1231
        %v1233 = vsub.f32 %v1219, %v1224
        %v1234 = vsub.f32 %v1220, %v1226
        %v1235 = vsub.f32 %v1221, %v1228
        %v1236 = vsub.f32 %v1222, %v1232
        %v1237 = vmul.f32 %v1233, 1.442695
        %v1238 = vpow.pop %v1237
        %v1239 = vmul.f32 %v1234, 1.442695
        %v1240 = vpow.pop %v1239
        %v1241 = vmul.f32 %v1235, 1.442695
        %v1242 = vpow.pop %v1241
        %v1243 = vmul.f32 %v1236, 1.442695
        %v1244 = vpow.pop %v1243
        %v1245 = vld [vmem:[%s7] sm:$0xff]
        %v1246 = vld [vmem:[%s7 + $0x8] sm:$0xff]
        %v1247 = vld [vmem:[%s7 + $0x10] sm:$0xff]
        %v1248 = vld [vmem:[%s7 + $0x18] sm:$0xff]
        %v1249 = vld [vmem:[%s7 + $0x20] sm:$0xff]
        %v1250 = vld [vmem:[%s7 + $0x28] sm:$0xff]
        %v1251 = vld [vmem:[%s7 + $0x30] sm:$0xff]
        %v1252 = vld [vmem:[%s7 + $0x38] sm:$0xff]
        %v1253 = vld [vmem:[%s7 + $0x40] sm:$0xff]
        %v1254 = vld [vmem:[%s7 + $0x48] sm:$0xff]
        %v1255 = vld [vmem:[%s7 + $0x50] sm:$0xff]
        %v1256 = vld [vmem:[%s7 + $0x58] sm:$0xff]
        %v1257 = vld [vmem:[%s7 + $0x60] sm:$0xff]
        %v1258 = vld [vmem:[%s7 + $0x68] sm:$0xff]
        %v1259 = vld [vmem:[%s7 + $0x70] sm:$0xff]
        %v1260 = vld [vmem:[%s7 + $0x78] sm:$0xff]
        %1261 = vmatprep.subr.mxu0 0.0
        %1262 = vmatpush1.msra.mxu0 %v1245
        %1263 = vmatprep.subr.mxu0 0.0
        %1264 = vmatpush1.msra.mxu0 %v1246
        %1265 = vmatprep.subr.mxu0 0.0
        %1266 = vmatpush1.msra.mxu0 %v1247
        %1267 = vmatprep.subr.mxu0 0.0
        %1268 = vmatpush1.msra.mxu0 %v1248
        %1269 = vmatprep.subr.mxu0 0.0
        %1270 = vmatpush1.msra.mxu0 %v1249
        %1271 = vmatprep.subr.mxu0 0.0
        %1272 = vmatpush1.msra.mxu0 %v1250
        %1273 = vmatprep.subr.mxu0 0.0
        %1274 = vmatpush1.msra.mxu0 %v1251
        %1275 = vmatprep.subr.mxu0 0.0
        %1276 = vmatpush1.msra.mxu0 %v1252
        %1277 = vmatprep.subr.mxu0 0.0
        %1278 = vmatpush1.msra.mxu0 %v1253
        %1279 = vmatprep.subr.mxu0 0.0
        %1280 = vmatpush1.msra.mxu0 %v1254
        %1281 = vmatprep.subr.mxu0 0.0
        %1282 = vmatpush1.msra.mxu0 %v1255
        %1283 = vmatprep.subr.mxu0 0.0
        %1284 = vmatpush1.msra.mxu0 %v1256
        %1285 = vmatprep.subr.mxu0 0.0
        %1286 = vmatpush1.msra.mxu0 %v1257
        %1287 = vmatprep.subr.mxu0 0.0
        %1288 = vmatpush1.msra.mxu0 %v1258
        %1289 = vmatprep.subr.mxu0 0.0
        %1290 = vmatpush1.msra.mxu0 %v1259
        %1291 = vmatprep.subr.mxu0 0.0
        %1292 = vmatpush1.msra.mxu0 %v1260
        %1293 = vmatprep.subr.mxu0 0.0
        %1294 = vmatpush1.msra.mxu0 0.0
        %1295 = vmatprep.subr.mxu0 0.0
        %1296 = vmatpush1.msra.mxu0 0.0
        %1297 = vmatprep.subr.mxu0 0.0
        %1298 = vmatpush1.msra.mxu0 0.0
        %1299 = vmatprep.subr.mxu0 0.0
        %1300 = vmatpush1.msra.mxu0 0.0
        %1301 = vmatprep.subr.mxu0 0.0
        %1302 = vmatpush1.msra.mxu0 0.0
        %1303 = vmatprep.subr.mxu0 0.0
        %1304 = vmatpush1.msra.mxu0 0.0
        %1305 = vmatprep.subr.mxu0 0.0
        %1306 = vmatpush1.msra.mxu0 0.0
        %1307 = vmatprep.subr.mxu0 0.0
        %1308 = vmatpush1.msra.mxu0 0.0
        %1309 = vmatprep.subr.mxu0 0.0
        %1310 = vmatpush1.msra.mxu0 0.0
        %1311 = vmatprep.subr.mxu0 0.0
        %1312 = vmatpush1.msra.mxu0 0.0
        %1313 = vmatprep.subr.mxu0 0.0
        %1314 = vmatpush1.msra.mxu0 0.0
        %1315 = vmatprep.subr.mxu0 0.0
        %1316 = vmatpush1.msra.mxu0 0.0
        %1317 = vmatprep.subr.mxu0 0.0
        %1318 = vmatpush1.msra.mxu0 0.0
        %1319 = vmatprep.subr.mxu0 0.0
        %1320 = vmatpush1.msra.mxu0 0.0
        %1321 = vmatprep.subr.mxu0 0.0
        %1322 = vmatpush1.msra.mxu0 0.0
        %1323 = vmatprep.subr.mxu0 0.0
        %1324 = vmatpush1.msra.mxu0 0.0
        %1325 = vmatprep.mubr.f32.mxu0 0.0
        %1326 = vmatmul.mubr.f32.gmra.mrb[0].mxu0 %v1238
        %v1327 = vpop.f32.mrb[0].mxu0
        %v1328 = vadd.f32 0.0, %v1327
        %v1329 = vpop.f32.mrb[0].mxu0
        %1330 = vmatprep.mubr.f32.mxu0 0.0
        %1331 = vmatmul.mubr.f32.gmra.mrb[0].mxu0 %v1240
        %v1332 = vpop.f32.mrb[0].mxu0
        %v1333 = vadd.f32 0.0, %v1332
        %v1334 = vpop.f32.mrb[0].mxu0
        %1335 = vmatprep.mubr.f32.mxu0 0.0
        %1336 = vmatmul.mubr.f32.gmra.mrb[0].mxu0 %v1242
        %v1337 = vpop.f32.mrb[0].mxu0
        %v1338 = vadd.f32 0.0, %v1337
        %v1339 = vpop.f32.mrb[0].mxu0
        %1340 = vmatprep.mubr.f32.mxu0 0.0
        %1341 = vmatmul.mubr.f32.gmra.mrb[0].mxu0 %v1244
        %v1342 = vpop.f32.mrb[0].mxu0
        %v1343 = vadd.f32 0.0, %v1342
        %v1344 = vpop.f32.mrb[0].mxu0
        %1345 = vdwg.mxu0
        %v1346 = vmax.f32 %v1328, 1e-30
        %v1347 = vmax.f32 %v1333, 1e-30
        %v1348 = vmax.f32 %v1338, 1e-30
        %v1349 = vmax.f32 %v1343, 1e-30
        %v1350 = vrcp.pop %v1346
        %v1351 = vrcp.pop %v1347
        %v1352 = vrcp.pop %v1348
        %v1353 = vrcp.pop %v1349
        %v1354 = vmul.f32 %v1238, %v1350
        %v1355 = vmul.f32 %v1240, %v1351
        %v1356 = vmul.f32 %v1242, %v1352
        %v1357 = vmul.f32 %v1244, %v1353
        %v1358 = vlaneseq
        %v1359 = vand.u32 %v1358, 127
        %vm1360 = vcmp.lt.s32.totalorder %v1359, 40
        %v1361 = vsel %vm1360, %v1354, 0.0
        %v1362 = vsel %vm1360, %v1355, 0.0
        %v1363 = vsel %vm1360, %v1356, 0.0
        %v1364 = vsel %vm1360, %v1357, 0.0
        %1365 = vst [vmem:[%s383] sm:$0xff] %v1361
        %1366 = vst [vmem:[%s383 + $0x8] sm:$0xff] %v1362
        %1367 = vst [vmem:[%s383 + $0x10] sm:$0xff] %v1363
        %1368 = vst [vmem:[%s383 + $0x18] sm:$0xf] %v1364
        %1369 = vst [vmem:[%s383 + $0x1c] sm:$0xf] 0.0
        %s1370 = sand.u32 %s213, 1
        %s1371 = scalar_lea.sflag [#allocation4], %s1370
        %s1372 = sand.u32 %s213, 1
        %s1373 = smul.addr %s1372, 32
        %s1374 = scalar_lea.vmem [#allocation10], %s1373
        // Predicated region
        $region69: #{tpu_custom_call.1} parent=51 // pred_check
          %p1375 = pneg %p223
        $region70: #{tpu_custom_call.1} parent=51 // pred_check_branch
          %1377 = sbr.rel (%p1375) target = $region72
        $region71: #{tpu_custom_call.1} parent=51 // pred_region
          %s1378 = smul.u32 4, %s27
          %s1380 = ssub.s32 512, 512
          %1381 = vsyncadd %s1371, %s1380
          %s1382 = smul.addr %s1378, 128
          %s1383 = scalar_lea.hbm %s8, %s1382
          %s1384 = sshll.u32 %s1374, 4
          %s1385 = int_to_ptr.vmem [resolvable:$true] %s1384
          %1390 = dma.vmem_to_hbm [thread:$0]  %s1385, 512, %s1383, %s1371, 128, 128, 8
        $region72: #{tpu_custom_call.1} parent=51 // pred_fallthru
          _
      $region52: #{tpu_custom_call.1} parent=5 // pred_fallthru
        _
      %p1391 = scmp.le.s32.totalorder 2, %s22
      // Predicated region
      $region73: #{tpu_custom_call.1} parent=5 // pred_check
        %p1392 = pneg %p1391
      $region74: #{tpu_custom_call.1} parent=5 // pred_check_branch
        %1394 = sbr.rel (%p1392) target = $region76
      $region75: #{tpu_custom_call.1} parent=5 // pred_region
        %s1395 = ssub.s32 %s22, 2
        // Predicated region
        $region77: #{tpu_custom_call.1} parent=75 // pred_check
          %p1396 = pneg %p229
        $region78: #{tpu_custom_call.1} parent=75 // pred_check_branch
          %1398 = sbr.rel (%p1396) target = $region80
        $region79: #{tpu_custom_call.1} parent=75 // pred_region
          %s1399 = sand.u32 %s214, 1
          %s1400 = scalar_lea.sflag [#allocation4], %s1399
          %s1401 = sand.u32 %s214, 1
          %s1402 = smul.addr %s1401, 32
          %s1403 = scalar_lea.vmem [#allocation10], %s1402
          %1404 = dma.done %s1400, 512
        $region80: #{tpu_custom_call.1} parent=75 // pred_fallthru
          _
      $region76: #{tpu_custom_call.1} parent=5 // pred_fallthru
        _
    $region6: #{tpu_custom_call.1} parent=1 // loop_footer
      %s26 = sadd.s32 1, %s22
    $region7: #{tpu_custom_call.1} parent=1 // loop_footer_branch
      %21 = sbr.rel target = $region3
    $region8: #{tpu_custom_call.1} parent=1 // loop_exit
      _
    %1405 = vsyncpa [#allocation3], 1
    %s1406 = scalar_lea.sflag [#allocation3], 1
    %1407 = vsyncpa %s1406, 1
    %1408 = vsyncpa [#allocation6], 1
    %1409 = vsyncpa [#allocation9], 1
    %1410 = vsyncpa [#allocation4], 1
    %s1411 = scalar_lea.sflag [#allocation4], 1
    %1412 = vsyncpa %s1411, 1

</llo_original>
